<compile_context>
chip_gen: v5e
topology: v5e:2x2
jax: 0.10.0
libtpu: 0.0.40
codegen_flags: <defaults>
</compile_context>

<pallas_src>
import math

import jax
import jax.numpy as jnp
from jax.experimental import pallas as pl
from jax.experimental.pallas import tpu as pltpu

EPS = 1e-5                     # torch.nn.GroupNorm default eps
NUM_GROUPS = 32                # GroupNorm(num_groups=32, ...)
INV_SQRT2 = 1.0 / math.sqrt(2.0)


# --------------------------------------------------------------------------- #
# Kernel
# --------------------------------------------------------------------------- #
def _make_kernel(mm_dtype, inv_group_size, compensate):
    """Fused (Linear -> GroupNorm32 -> ReLU) x2 + residual kernel.

    All matmuls use `mm_dtype` operands on the MXU with f32 accumulation.  When
    `compensate` is True, f32 statistics operands are split into a (hi, lo)
    bf16 pair, keeping GroupNorm statistics f32-faithful while every MXU pass
    stays single-pass bf16.
    """

    def mxu(a, b):
        return jnp.dot(a, b, preferred_element_type=jnp.float32)

    def stat_dot(lhs_f32, rhs):
        # Compensated matmul: f32-faithful LHS through one or two bf16 passes.
        hi = lhs_f32.astype(mm_dtype)
        out = mxu(hi, rhs)
        if compensate:
            lo = (lhs_f32 - hi.astype(jnp.float32)).astype(mm_dtype)
            out = out + mxu(lo, rhs)        # back-to-back dot, same staged RHS
        return out

    def kernel(x_ref, w1_ref, wg1_ref, g1_ref, b1_ref,
               w2_ref, wg2_ref, g2_ref, b2_ref,
               gm_fg_ref, gm_gf_ref, o_ref):
        x = x_ref[...]                      # (TB, F) f32 activation tile
        gm_fg = gm_fg_ref[...]              # (F, G) 0/1 group map, mm_dtype
        gm_gf = gm_gf_ref[...]              # (G, F) 0/1 group map, mm_dtype

        def linear_gn_relu(h_in, w_ref, wg_ref, gamma_ref, beta_ref):
            lhs = h_in.astype(mm_dtype)                        # shared LHS stream
            # Linear (bias=False): single-pass MXU matmul, f32 accumulation.
            h = mxu(lhs, w_ref[...])                           # (TB, F)

            # Group mean folded into the weights: mean = x @ (W @ gm) / gs.
            mean_g = mxu(lhs, wg_ref[0])
            if compensate:
                mean_g = mean_g + mxu(lhs, wg_ref[1])          # lo half of W @ gm
            mean_g = mean_g * inv_group_size                   # (TB, G) f32

            # Centered statistics (no E[h^2]-mean^2 cancellation).
            mean_bc = stat_dot(mean_g, gm_gf)                  # (TB, F)
            hc = h - mean_bc
            var_g = stat_dot(hc * hc, gm_fg) * inv_group_size  # (TB, G) biased var
            scale_g = jax.lax.rsqrt(jnp.maximum(var_g, 0.0) + EPS)
            scale_bc = stat_dot(scale_g, gm_gf)                # (TB, F)

            # Affine (gamma/beta kept in f32 on the VPU) + ReLU.
            hn = hc * scale_bc * gamma_ref[...] + beta_ref[...]
            # TODO(synk): Dropout is identity (eval mode); no RNG mask applied.
            return jnp.maximum(hn, 0.0)

        h = linear_gn_relu(x, w1_ref, wg1_ref, g1_ref, b1_ref)
        h = linear_gn_relu(h, w2_ref, wg2_ref, g2_ref, b2_ref)
        o_ref[...] = (x + h) * INV_SQRT2

    return kernel


# --------------------------------------------------------------------------- #
# Host-side helpers
# --------------------------------------------------------------------------- #
def _round_down(v, m):
    return (v // m) * m


def _vmem_capacity_bytes():
    """Physical VMEM of the local TPU; conservative 64 MiB (v7x-sized) fallback."""
    try:
        cap = getattr(pltpu.get_tpu_info(), "vmem_capacity_bytes", None)
        if cap:
            return int(cap)
    except Exception:
        pass
    return 64 << 20


def _batch_dim_semantics():
    """CORE_PARALLEL on multi-TensorCore chips (v7x) so the batch grid axis is
    sharded across cores; plain PARALLEL elsewhere."""
    try:
        kind = jax.devices()[0].device_kind.lower().replace(" ", "")
    except Exception:
        kind = ""
    if "v7" in kind or "tpu7" in kind:
        return (pltpu.CORE_PARALLEL,)
    return (pltpu.PARALLEL,)


def residual_linear_layer(x, w1, gamma1, beta1, w2, gamma2, beta2, *,
                          tile_b=512, matmul_dtype=jnp.bfloat16,
                          compensated_stats=True):
    """ResidualLinearLayer forward (eval mode).

    Args:
      x: (B, F) float32 activations.
      w1, w2: (F_in, F_out) Linear weights pre-transposed so y = x @ w
        (== x @ W_torch.T).  Linear has bias=False in the module.
      gamma*, beta*: (F,) GroupNorm(32) affine parameters.
      tile_b: requested batch rows per grid step (auto-clamped / aligned).
      matmul_dtype: MXU operand dtype.  bfloat16 (default, recommended on
        v5e/v6e/v7x) keeps every matmul single-pass; float32 reproduces the
        PyTorch numerics but lowers to multi-pass MXU emulation (validation).
      compensated_stats: hi/lo-split the GroupNorm statistics operands so the
        statistics stay f32-faithful while still using single-pass bf16 MXU
        matmuls (costs 4 extra tiny (·,G)-class matmuls per block, <=13% extra
        MACs for F >= 512).  Set False for the minimum-MAC variant.
    """
    B, F = x.shape
    G = NUM_GROUPS
    assert F % G == 0, "GroupNorm(32) needs num_channels % 32 == 0"
    gs = F // G

    mm_dtype = jnp.dtype(matmul_dtype)
    compensate = bool(compensated_stats) and mm_dtype != jnp.dtype(jnp.float32)
    x = x.astype(jnp.float32)

    # ---- host-side precompute (tiny relative to the weights) ----------------
    grp = jnp.arange(F, dtype=jnp.int32) // gs
    gm = (grp[:, None] == jnp.arange(G, dtype=jnp.int32)[None, :]).astype(jnp.float32)
    gm_fg = gm.astype(mm_dtype)            # (F, G) 0/1 group map (exact in bf16)
    gm_gf = gm.T.astype(mm_dtype)          # (G, F)

    def prep_linear(w):
        wq = w.astype(jnp.float32).astype(mm_dtype)            # MXU weight
        # Per-group column sums of the *quantized* weight, so the folded mean
        # matches the mean of h = x @ wq; 1/group_size is applied in f32 inside
        # the kernel.
        wsum = wq.astype(jnp.float32).reshape(F, G, gs).sum(axis=-1)   # (F, G)
        if compensate:
            hi = wsum.astype(mm_dtype)
            lo = (wsum - hi.astype(jnp.float32)).astype(mm_dtype)
            wg = jnp.stack([hi, lo])                            # (2, F, G)
        else:
            wg = wsum.astype(mm_dtype)[None]                    # (1, F, G)
        return wq, wg

    w1q, wg1 = prep_linear(w1)
    w2q, wg2 = prep_linear(w2)
    g1 = gamma1.reshape(1, F).astype(jnp.float32)
    b1 = beta1.reshape(1, F).astype(jnp.float32)
    g2 = gamma2.reshape(1, F).astype(jnp.float32)
    b2 = beta2.reshape(1, F).astype(jnp.float32)

    # ---- batch tiling --------------------------------------------------------
    # 16-row alignment for bf16 sublane packing (8 for f32).  No wrapper-side
    # jnp.pad / out[:B] HBM passes: Pallas masks the ragged last tile itself.
    align = 16 if mm_dtype == jnp.dtype(jnp.bfloat16) else 8
    if B >= align:
        tile_b = max(align, min(_round_down(int(tile_b), align), _round_down(B, align)))
        x_in, Bp = x, B
    else:   # tiny-batch fallback: pad up to one aligned tile
        tile_b = align
        x_in, Bp = jnp.pad(x, ((0, align - B), (0, 0))), align

    # ---- VMEM budget (generation-aware) --------------------------------------
    wbytes = mm_dtype.itemsize
    nsplit = 2 if compensate else 1
    const_bytes = (2 * F * F * wbytes              # w1, w2 (single-buffered residents)
                   + 2 * nsplit * F * G * wbytes   # folded group-sum weights
                   + 2 * F * G * wbytes            # group maps
                   + 4 * F * 4)                    # gamma / beta

    def vmem_needed(tb):
        return (const_bytes
                + 2 * 2 * tb * F * 4               # x / out tiles, double-buffered
                + 12 * tb * F * 4                  # in-kernel f32 temporaries
                + (4 << 20))                       # headroom

    cap = _vmem_capacity_bytes()
    budget = cap - cap // 8                        # stay below physical VMEM
    while vmem_needed(tile_b) > budget and tile_b > align:
        tile_b = max(align, _round_down(tile_b // 2, align))
    vmem_limit = int(min(max(vmem_needed(tile_b), 24 << 20), budget))

    grid = (pl.cdiv(Bp, tile_b),)

    act_spec = pl.BlockSpec((tile_b, F), lambda i: (i, 0))
    out_spec = pl.BlockSpec((tile_b, F), lambda i: (i, 0))
    # Constant operands: whole-array VMEM residents (single copy, no per-step
    # DMA, no double-buffered duplicates).
    resident = pl.BlockSpec(memory_space=pltpu.MemorySpace.VMEM)

    kernel = _make_kernel(mm_dtype, 1.0 / gs, compensate)

    out = pl.pallas_call(
        kernel,
        out_shape=jax.ShapeDtypeStruct((Bp, F), jnp.float32),
        grid=grid,
        in_specs=[act_spec,
                  resident, resident, resident, resident,   # w1, wg1, gamma1, beta1
                  resident, resident, resident, resident,   # w2, wg2, gamma2, beta2
                  resident, resident],                      # gm_fg, gm_gf
        out_specs=out_spec,
        compiler_params=pltpu.CompilerParams(
            dimension_semantics=_batch_dim_semantics(),
            vmem_limit_bytes=vmem_limit,
        ),
    )(x_in, w1q, wg1, g1, b1, w2q, wg2, g2, b2, gm_fg, gm_gf)

    return out if Bp == B else out[:B]


# --------------------------------------------------------------------------- #
# Pure-JAX reference (PyTorch module semantics, eval mode)
# --------------------------------------------------------------------------- #
def _reference(x, w1, gamma1, beta1, w2, gamma2, beta2, matmul_dtype=jnp.float32):
    def block(h, w, gamma, beta):
        h = jnp.dot(h.astype(matmul_dtype), w.astype(matmul_dtype),
                    preferred_element_type=jnp.float32)
        Bv, Fv = h.shape
        hg = h.reshape(Bv, NUM_GROUPS, Fv // NUM_GROUPS)
        mean = hg.mean(axis=-1, keepdims=True)
        var = hg.var(axis=-1, keepdims=True)           # biased, like torch GroupNorm
        hn = ((hg - mean) / jnp.sqrt(var + EPS)).reshape(Bv, Fv)
        return jnp.maximum(hn * gamma[None, :] + beta[None, :], 0.0)

    h = block(x, w1, gamma1, beta1)
    h = block(h, w2, gamma2, beta2)
    return (x + h) * INV_SQRT2


if __name__ == "__main__":
    B, F = 50, 128    # F divisible by 32; B not a tile multiple (ragged last tile)

    key = jax.random.PRNGKey(0)
    kx, k1, k2, kg1, kb1, kg2, kb2 = jax.random.split(key, 7)

    x = jax.random.normal(kx, (B, F), dtype=jnp.float32)
    bound = 1.0 / math.sqrt(F)
    w1 = jax.random.uniform(k1, (F, F), minval=-bound, maxval=bound, dtype=jnp.float32)
    w2 = jax.random.uniform(k2, (F, F), minval=-bound, maxval=bound, dtype=jnp.float32)
    gamma1 = 1.0 + 0.1 * jax.random.normal(kg1, (F,), dtype=jnp.float32)
    beta1 = 0.1 * jax.random.normal(kb1, (F,), dtype=jnp.float32)
    gamma2 = 1.0 + 0.1 * jax.random.normal(kg2, (F,), dtype=jnp.float32)
    beta2 = 0.1 * jax.random.normal(kb2, (F,), dtype=jnp.float32)

    # 1) f32-operand path: matches the module's f32 semantics.
    out_f32 = jax.block_until_ready(
        residual_linear_layer(x, w1, gamma1, beta1, w2, gamma2, beta2,
                              matmul_dtype=jnp.float32))
    ref_f32 = _reference(x, w1, gamma1, beta1, w2, gamma2, beta2, jnp.float32)
    assert out_f32.shape == (B, F)
    assert jnp.allclose(out_f32, ref_f32, atol=2e-2, rtol=2e-2), (
        f"f32 path max abs err = {jnp.max(jnp.abs(out_f32 - ref_f32))}")

    # 2) Default bf16-MXU path (compensated, f32-faithful GroupNorm stats):
    #    compare against a precision-matched reference.
    out_bf16 = jax.block_until_ready(
        residual_linear_layer(x, w1, gamma1, beta1, w2, gamma2, beta2))
    ref_bf16 = _reference(x, w1, gamma1, beta1, w2, gamma2, beta2, jnp.bfloat16)
    assert jnp.allclose(out_bf16, ref_bf16, atol=2e-2, rtol=2e-2), (
        f"bf16 path max abs err = {jnp.max(jnp.abs(out_bf16 - ref_bf16))}")

    print("KERNEL_OK")
</pallas_src>

<mosaic_0001>
module attributes {stable_mosaic.version = 11 : i64} {
  func.func @kernel(%arg0: i32, %arg1: memref<48x128xf32, #tpu.memory_space<vmem>>, %arg2: memref<128x128xf32, #tpu.memory_space<vmem>>, %arg3: memref<1x128x32xf32, #tpu.memory_space<vmem>>, %arg4: memref<1x128xf32, #tpu.memory_space<vmem>>, %arg5: memref<1x128xf32, #tpu.memory_space<vmem>>, %arg6: memref<128x128xf32, #tpu.memory_space<vmem>>, %arg7: memref<1x128x32xf32, #tpu.memory_space<vmem>>, %arg8: memref<1x128xf32, #tpu.memory_space<vmem>>, %arg9: memref<1x128xf32, #tpu.memory_space<vmem>>, %arg10: memref<128x32xf32, #tpu.memory_space<vmem>>, %arg11: memref<32x128xf32, #tpu.memory_space<vmem>>, %arg12: memref<48x128xf32, #tpu.memory_space<vmem>>) attributes {dimension_semantics = [#tpu.dimension_semantics<parallel>], iteration_bounds = array<i64: 2>, scalar_prefetch = 0 : i64, scratch_operands = 0 : i64, tpu.core_type = #tpu.core_type<tc>, window_params = [{transform_indices = @transform_0, window_bounds = array<i64: 48, 128>}, {pipeline_mode = #tpu.pipeline_mode<synchronous>, transform_indices = @transform_1, window_bounds = array<i64: 128, 128>}, {pipeline_mode = #tpu.pipeline_mode<synchronous>, transform_indices = @transform_2, window_bounds = array<i64: 1, 128, 32>}, {pipeline_mode = #tpu.pipeline_mode<synchronous>, transform_indices = @transform_3, window_bounds = array<i64: 1, 128>}, {pipeline_mode = #tpu.pipeline_mode<synchronous>, transform_indices = @transform_4, window_bounds = array<i64: 1, 128>}, {pipeline_mode = #tpu.pipeline_mode<synchronous>, transform_indices = @transform_5, window_bounds = array<i64: 128, 128>}, {pipeline_mode = #tpu.pipeline_mode<synchronous>, transform_indices = @transform_6, window_bounds = array<i64: 1, 128, 32>}, {pipeline_mode = #tpu.pipeline_mode<synchronous>, transform_indices = @transform_7, window_bounds = array<i64: 1, 128>}, {pipeline_mode = #tpu.pipeline_mode<synchronous>, transform_indices = @transform_8, window_bounds = array<i64: 1, 128>}, {pipeline_mode = #tpu.pipeline_mode<synchronous>, transform_indices = @transform_9, window_bounds = array<i64: 128, 32>}, {pipeline_mode = #tpu.pipeline_mode<synchronous>, transform_indices = @transform_10, window_bounds = array<i64: 32, 128>}, {transform_indices = @transform_11, window_bounds = array<i64: 48, 128>}]} {
    %c0 = arith.constant 0 : index
    %c0_0 = arith.constant 0 : index
    %0 = vector.load %arg1[%c0, %c0_0] : memref<48x128xf32, #tpu.memory_space<vmem>>, vector<48x128xf32>
    %c0_1 = arith.constant 0 : index
    %c0_2 = arith.constant 0 : index
    %1 = vector.load %arg10[%c0_1, %c0_2] : memref<128x32xf32, #tpu.memory_space<vmem>>, vector<128x32xf32>
    %c0_3 = arith.constant 0 : index
    %c0_4 = arith.constant 0 : index
    %2 = vector.load %arg11[%c0_3, %c0_4] : memref<32x128xf32, #tpu.memory_space<vmem>>, vector<32x128xf32>
    %c0_5 = arith.constant 0 : index
    %c0_6 = arith.constant 0 : index
    %3 = vector.load %arg2[%c0_5, %c0_6] : memref<128x128xf32, #tpu.memory_space<vmem>>, vector<128x128xf32>
    %cst = arith.constant dense<0.000000e+00> : vector<48x128xf32>
    %4 = tpu.matmul %0, %3, %cst {dimension_numbers = #tpu.dot_dimension_numbers<[1], [0], [0], [1], [0, 0, 1, 1], [], []>} : vector<48x128xf32>, vector<128x128xf32>, vector<48x128xf32> -> vector<48x128xf32>
    %c0_7 = arith.constant 0 : index
    %c0_8 = arith.constant 0 : index
    %c0_9 = arith.constant 0 : index
    %5 = vector.load %arg3[%c0_7, %c0_8, %c0_9] : memref<1x128x32xf32, #tpu.memory_space<vmem>>, vector<1x128x32xf32>
    %6 = vector.shape_cast %5 : vector<1x128x32xf32> to vector<128x32xf32>
    %cst_10 = arith.constant dense<0.000000e+00> : vector<48x32xf32>
    %7 = tpu.matmul %0, %6, %cst_10 {dimension_numbers = #tpu.dot_dimension_numbers<[1], [0], [0], [1], [0, 0, 1, 1], [], []>} : vector<48x128xf32>, vector<128x32xf32>, vector<48x32xf32> -> vector<48x32xf32>
    %cst_11 = arith.constant 2.500000e-01 : f32
    %8 = vector.broadcast %cst_11 : f32 to vector<48x32xf32>
    %9 = arith.mulf %7, %8 : vector<48x32xf32>
    %cst_12 = arith.constant dense<0.000000e+00> : vector<48x128xf32>
    %10 = tpu.matmul %9, %2, %cst_12 {dimension_numbers = #tpu.dot_dimension_numbers<[1], [0], [0], [1], [0, 0, 1, 1], [], []>} : vector<48x32xf32>, vector<32x128xf32>, vector<48x128xf32> -> vector<48x128xf32>
    %11 = arith.subf %4, %10 : vector<48x128xf32>
    %12 = arith.mulf %11, %11 : vector<48x128xf32>
    %cst_13 = arith.constant dense<0.000000e+00> : vector<48x32xf32>
    %13 = tpu.matmul %12, %1, %cst_13 {dimension_numbers = #tpu.dot_dimension_numbers<[1], [0], [0], [1], [0, 0, 1, 1], [], []>} : vector<48x128xf32>, vector<128x32xf32>, vector<48x32xf32> -> vector<48x32xf32>
    %cst_14 = arith.constant 2.500000e-01 : f32
    %14 = vector.broadcast %cst_14 : f32 to vector<48x32xf32>
    %15 = arith.mulf %13, %14 : vector<48x32xf32>
    %cst_15 = arith.constant 0.000000e+00 : f32
    %16 = vector.broadcast %cst_15 : f32 to vector<48x32xf32>
    %17 = arith.maximumf %15, %16 : vector<48x32xf32>
    %cst_16 = arith.constant 9.99999974E-6 : f32
    %18 = vector.broadcast %cst_16 : f32 to vector<48x32xf32>
    %19 = arith.addf %17, %18 : vector<48x32xf32>
    %20 = math.rsqrt %19 : vector<48x32xf32>
    %cst_17 = arith.constant dense<0.000000e+00> : vector<48x128xf32>
    %21 = tpu.matmul %20, %2, %cst_17 {dimension_numbers = #tpu.dot_dimension_numbers<[1], [0], [0], [1], [0, 0, 1, 1], [], []>} : vector<48x32xf32>, vector<32x128xf32>, vector<48x128xf32> -> vector<48x128xf32>
    %22 = arith.mulf %11, %21 : vector<48x128xf32>
    %c0_18 = arith.constant 0 : index
    %c0_19 = arith.constant 0 : index
    %23 = vector.load %arg4[%c0_18, %c0_19] : memref<1x128xf32, #tpu.memory_space<vmem>>, vector<1x128xf32>
    %24 = vector.broadcast %23 : vector<1x128xf32> to vector<48x128xf32>
    %25 = arith.mulf %22, %24 : vector<48x128xf32>
    %c0_20 = arith.constant 0 : index
    %c0_21 = arith.constant 0 : index
    %26 = vector.load %arg5[%c0_20, %c0_21] : memref<1x128xf32, #tpu.memory_space<vmem>>, vector<1x128xf32>
    %27 = vector.broadcast %26 : vector<1x128xf32> to vector<48x128xf32>
    %28 = arith.addf %25, %27 : vector<48x128xf32>
    %cst_22 = arith.constant 0.000000e+00 : f32
    %29 = vector.broadcast %cst_22 : f32 to vector<48x128xf32>
    %30 = arith.maximumf %28, %29 : vector<48x128xf32>
    %c0_23 = arith.constant 0 : index
    %c0_24 = arith.constant 0 : index
    %31 = vector.load %arg6[%c0_23, %c0_24] : memref<128x128xf32, #tpu.memory_space<vmem>>, vector<128x128xf32>
    %cst_25 = arith.constant dense<0.000000e+00> : vector<48x128xf32>
    %32 = tpu.matmul %30, %31, %cst_25 {dimension_numbers = #tpu.dot_dimension_numbers<[1], [0], [0], [1], [0, 0, 1, 1], [], []>} : vector<48x128xf32>, vector<128x128xf32>, vector<48x128xf32> -> vector<48x128xf32>
    %c0_26 = arith.constant 0 : index
    %c0_27 = arith.constant 0 : index
    %c0_28 = arith.constant 0 : index
    %33 = vector.load %arg7[%c0_26, %c0_27, %c0_28] : memref<1x128x32xf32, #tpu.memory_space<vmem>>, vector<1x128x32xf32>
    %34 = vector.shape_cast %33 : vector<1x128x32xf32> to vector<128x32xf32>
    %cst_29 = arith.constant dense<0.000000e+00> : vector<48x32xf32>
    %35 = tpu.matmul %30, %34, %cst_29 {dimension_numbers = #tpu.dot_dimension_numbers<[1], [0], [0], [1], [0, 0, 1, 1], [], []>} : vector<48x128xf32>, vector<128x32xf32>, vector<48x32xf32> -> vector<48x32xf32>
    %cst_30 = arith.constant 2.500000e-01 : f32
    %36 = vector.broadcast %cst_30 : f32 to vector<48x32xf32>
    %37 = arith.mulf %35, %36 : vector<48x32xf32>
    %cst_31 = arith.constant dense<0.000000e+00> : vector<48x128xf32>
    %38 = tpu.matmul %37, %2, %cst_31 {dimension_numbers = #tpu.dot_dimension_numbers<[1], [0], [0], [1], [0, 0, 1, 1], [], []>} : vector<48x32xf32>, vector<32x128xf32>, vector<48x128xf32> -> vector<48x128xf32>
    %39 = arith.subf %32, %38 : vector<48x128xf32>
    %40 = arith.mulf %39, %39 : vector<48x128xf32>
    %cst_32 = arith.constant dense<0.000000e+00> : vector<48x32xf32>
    %41 = tpu.matmul %40, %1, %cst_32 {dimension_numbers = #tpu.dot_dimension_numbers<[1], [0], [0], [1], [0, 0, 1, 1], [], []>} : vector<48x128xf32>, vector<128x32xf32>, vector<48x32xf32> -> vector<48x32xf32>
    %cst_33 = arith.constant 2.500000e-01 : f32
    %42 = vector.broadcast %cst_33 : f32 to vector<48x32xf32>
    %43 = arith.mulf %41, %42 : vector<48x32xf32>
    %cst_34 = arith.constant 0.000000e+00 : f32
    %44 = vector.broadcast %cst_34 : f32 to vector<48x32xf32>
    %45 = arith.maximumf %43, %44 : vector<48x32xf32>
    %cst_35 = arith.constant 9.99999974E-6 : f32
    %46 = vector.broadcast %cst_35 : f32 to vector<48x32xf32>
    %47 = arith.addf %45, %46 : vector<48x32xf32>
    %48 = math.rsqrt %47 : vector<48x32xf32>
    %cst_36 = arith.constant dense<0.000000e+00> : vector<48x128xf32>
    %49 = tpu.matmul %48, %2, %cst_36 {dimension_numbers = #tpu.dot_dimension_numbers<[1], [0], [0], [1], [0, 0, 1, 1], [], []>} : vector<48x32xf32>, vector<32x128xf32>, vector<48x128xf32> -> vector<48x128xf32>
    %50 = arith.mulf %39, %49 : vector<48x128xf32>
    %c0_37 = arith.constant 0 : index
    %c0_38 = arith.constant 0 : index
    %51 = vector.load %arg8[%c0_37, %c0_38] : memref<1x128xf32, #tpu.memory_space<vmem>>, vector<1x128xf32>
    %52 = vector.broadcast %51 : vector<1x128xf32> to vector<48x128xf32>
    %53 = arith.mulf %50, %52 : vector<48x128xf32>
    %c0_39 = arith.constant 0 : index
    %c0_40 = arith.constant 0 : index
    %54 = vector.load %arg9[%c0_39, %c0_40] : memref<1x128xf32, #tpu.memory_space<vmem>>, vector<1x128xf32>
    %55 = vector.broadcast %54 : vector<1x128xf32> to vector<48x128xf32>
    %56 = arith.addf %53, %55 : vector<48x128xf32>
    %cst_41 = arith.constant 0.000000e+00 : f32
    %57 = vector.broadcast %cst_41 : f32 to vector<48x128xf32>
    %58 = arith.maximumf %56, %57 : vector<48x128xf32>
    %59 = arith.addf %0, %58 : vector<48x128xf32>
    %cst_42 = arith.constant 0.707106769 : f32
    %60 = vector.broadcast %cst_42 : f32 to vector<48x128xf32>
    %61 = arith.mulf %59, %60 : vector<48x128xf32>
    %c0_43 = arith.constant 0 : index
    %c0_44 = arith.constant 0 : index
    %62 = vector.load %arg12[%c0_43, %c0_44] : memref<48x128xf32, #tpu.memory_space<vmem>>, vector<48x128xf32>
    tpu.vector_store %arg12[%c0_43, %c0_44], %61 {strides = array<i32>} : memref<48x128xf32, #tpu.memory_space<vmem>>, vector<48x128xf32>,
    return
  }
  func.func @transform_0(%arg0: i32) -> (i32, i32) {
    %c0_i32 = arith.constant 0 : i32
    %c0_i32_0 = arith.constant 0 : i32
    return %arg0, %c0_i32 : i32, i32
  }
  func.func @transform_1(%arg0: i32) -> (i32, i32) {
    %c0_i32 = arith.constant 0 : i32
    %c0_i32_0 = arith.constant 0 : i32
    %c0_i32_1 = arith.constant 0 : i32
    return %c0_i32, %c0_i32_0 : i32, i32
  }
  func.func @transform_2(%arg0: i32) -> (i32, i32, i32) {
    %c0_i32 = arith.constant 0 : i32
    %c0_i32_0 = arith.constant 0 : i32
    %c0_i32_1 = arith.constant 0 : i32
    %c0_i32_2 = arith.constant 0 : i32
    return %c0_i32, %c0_i32_0, %c0_i32_1 : i32, i32, i32
  }
  func.func @transform_3(%arg0: i32) -> (i32, i32) {
    %c0_i32 = arith.constant 0 : i32
    %c0_i32_0 = arith.constant 0 : i32
    %c0_i32_1 = arith.constant 0 : i32
    return %c0_i32, %c0_i32_0 : i32, i32
  }
  func.func @transform_4(%arg0: i32) -> (i32, i32) {
    %c0_i32 = arith.constant 0 : i32
    %c0_i32_0 = arith.constant 0 : i32
    %c0_i32_1 = arith.constant 0 : i32
    return %c0_i32, %c0_i32_0 : i32, i32
  }
  func.func @transform_5(%arg0: i32) -> (i32, i32) {
    %c0_i32 = arith.constant 0 : i32
    %c0_i32_0 = arith.constant 0 : i32
    %c0_i32_1 = arith.constant 0 : i32
    return %c0_i32, %c0_i32_0 : i32, i32
  }
  func.func @transform_6(%arg0: i32) -> (i32, i32, i32) {
    %c0_i32 = arith.constant 0 : i32
    %c0_i32_0 = arith.constant 0 : i32
    %c0_i32_1 = arith.constant 0 : i32
    %c0_i32_2 = arith.constant 0 : i32
    return %c0_i32, %c0_i32_0, %c0_i32_1 : i32, i32, i32
  }
  func.func @transform_7(%arg0: i32) -> (i32, i32) {
    %c0_i32 = arith.constant 0 : i32
    %c0_i32_0 = arith.constant 0 : i32
    %c0_i32_1 = arith.constant 0 : i32
    return %c0_i32, %c0_i32_0 : i32, i32
  }
  func.func @transform_8(%arg0: i32) -> (i32, i32) {
    %c0_i32 = arith.constant 0 : i32
    %c0_i32_0 = arith.constant 0 : i32
    %c0_i32_1 = arith.constant 0 : i32
    return %c0_i32, %c0_i32_0 : i32, i32
  }
  func.func @transform_9(%arg0: i32) -> (i32, i32) {
    %c0_i32 = arith.constant 0 : i32
    %c0_i32_0 = arith.constant 0 : i32
    %c0_i32_1 = arith.constant 0 : i32
    return %c0_i32, %c0_i32_0 : i32, i32
  }
  func.func @transform_10(%arg0: i32) -> (i32, i32) {
    %c0_i32 = arith.constant 0 : i32
    %c0_i32_0 = arith.constant 0 : i32
    %c0_i32_1 = arith.constant 0 : i32
    return %c0_i32, %c0_i32_0 : i32, i32
  }
  func.func @transform_11(%arg0: i32) -> (i32, i32) {
    %c0_i32 = arith.constant 0 : i32
    %c0_i32_0 = arith.constant 0 : i32
    return %arg0, %c0_i32 : i32, i32
  }
}

</mosaic_0001>

<llo_original>
// kernel: tpu_custom_call.1
$region0: #{tpu_custom_call.1}
  #allocation0 [shape = 'u32[]', space=smem, size = 0x4, offset = 0x4, fixed_abs, tag = 'smem constant byte address 0x4 - core index']
  #allocation1 [shape = 'u32[72,128]{1,0:T(1,128)}', space=vmem, size = 0x9000, scoped, tag = 'internal scratch']
  %s0 = inlined_call_operand.vmem [shape: f32[50,128], index: 0, kind: input, shape index: {}]
  %s1 = inlined_call_operand.vmem [shape: f32[128,128], index: 1, kind: input, shape index: {}]
  %s2 = inlined_call_operand.vmem [shape: f32[1,128,32], index: 2, kind: input, shape index: {}]
  %s3 = inlined_call_operand.vmem [shape: f32[1,128], index: 3, kind: input, shape index: {}]
  %s4 = inlined_call_operand.vmem [shape: f32[1,128], index: 4, kind: input, shape index: {}]
  %s5 = inlined_call_operand.vmem [shape: f32[128,128], index: 5, kind: input, shape index: {}]
  %s6 = inlined_call_operand.vmem [shape: f32[1,128,32], index: 6, kind: input, shape index: {}]
  %s7 = inlined_call_operand.vmem [shape: f32[1,128], index: 7, kind: input, shape index: {}]
  %s8 = inlined_call_operand.vmem [shape: f32[1,128], index: 8, kind: input, shape index: {}]
  %s9 = inlined_call_operand.vmem [shape: f32[128,32], index: 9, kind: input, shape index: {}]
  %s10 = inlined_call_operand.vmem [shape: f32[32,128], index: 10, kind: input, shape index: {}]
  %s11 = inlined_call_operand.hbm [shape: f32[50,128], index: 11, kind: output, shape index: {}]
  %s12 = sld [smem:[#allocation0]]
  $region77: #{tpu_custom_call.1} parent=0
    _
  %s14 = ssub.s32 1, %s12
  %s15 = scalar_select 0, %s14, %s12
  $region1: #{tpu_custom_call.1} parent=0
    #allocation2 [shape = 'u8[49152]{0}', space=vmem, size = 0xc000, scoped, tag = 'output window, operand 0']
    #allocation3 [shape = 's32[2]{0}', space=sflag, size = 0x8, scoped, tag = 'scoped memory for tpu_custom_call.1']
    %16 = vsyncpa [#allocation3], 0
    %s17 = scalar_lea.sflag [#allocation3], 1
    %18 = vsyncpa %s17, 0
    loop: start=0, step=1, limit=4
    $region2: #{tpu_custom_call.1} parent=1 // loop_pre_header
      _
    $region3: #{tpu_custom_call.1} parent=1 // loop_header
      %s20 = sphi 0, %s24
      %p21 = scmp.ge.s32.totalorder %s20, 4
      %s30 = sphi 0, %s32
      %s33 = sphi 0, %s30
      %s34 = sphi 0, %s33
      %s50 = sphi 0, %s34
      %s54 = sphi 0, %s54
      %s56 = sphi 0, %s54
      %s57 = sphi 0, %s56
      %s71 = sphi 0, %s57
      %s75 = sphi 0, %s75
      %s77 = sphi 0, %s75
      %s78 = sphi 0, %s77
      %s92 = sphi 0, %s78
      %s96 = sphi 0, %s96
      %s98 = sphi 0, %s96
      %s99 = sphi 0, %s98
      %s113 = sphi 0, %s99
      %s117 = sphi 0, %s117
      %s119 = sphi 0, %s117
      %s120 = sphi 0, %s119
      %s134 = sphi 0, %s120
      %s138 = sphi 0, %s138
      %s140 = sphi 0, %s138
      %s141 = sphi 0, %s140
      %s155 = sphi 0, %s141
      %s159 = sphi 0, %s159
      %s161 = sphi 0, %s159
      %s162 = sphi 0, %s161
      %s176 = sphi 0, %s162
      %s180 = sphi 0, %s180
      %s182 = sphi 0, %s180
      %s183 = sphi 0, %s182
      %s197 = sphi 0, %s183
      %s201 = sphi 0, %s201
      %s203 = sphi 0, %s201
      %s204 = sphi 0, %s203
      %s218 = sphi 0, %s204
      %s222 = sphi 0, %s222
      %s224 = sphi 0, %s222
      %s225 = sphi 0, %s224
      %s239 = sphi 0, %s225
      %s243 = sphi 0, %s243
      %s245 = sphi 0, %s243
      %s246 = sphi 0, %s245
      %s260 = sphi 0, %s246
      %s266 = sphi 0, %s268
      %s269 = sphi 0, %s266
      %s270 = sphi 0, %s269
      %s286 = sphi 0, %s270
    $region4: #{tpu_custom_call.1} parent=1 // loop_header_branch
      %23 = sbr.rel (%p21) target = $region8
    $region5: #{tpu_custom_call.1} parent=1 // loop_body
      %s25 = ssub.s32 %s20, 1
      %s26 = ssub.s32 %s20, 2
      %s27 = sadd.s32 %s20, 1
      %s28 = ssub.s32 %s20, %s27
      %p29 = scmp.eq.s32.totalorder %s28, 0
      %s31 = sadd.s32 %s30, 1
      %s32 = scalar_select %p29, %s30, %s31
      %p35 = pneg %p29
      %p36 = scmp.eq.s32.totalorder %s20, 1
      %p37 = por %p35, %p36
      %p38 = scmp.ne.s32.totalorder %s30, %s33
      %p39 = scmp.eq.s32.totalorder %s20, 0
      %p40 = por %p38, %p39
      %p41 = scmp.ne.s32.totalorder %s30, %s33
      %p42 = scmp.eq.s32.totalorder %s25, 1
      %p43 = por %p41, %p42
      %p44 = scmp.ne.s32.totalorder %s33, %s34
      %p45 = scmp.eq.s32.totalorder %s25, 0
      %p46 = por %p44, %p45
      %p47 = scmp.ne.s32.totalorder %s33, %s34
      %p48 = scmp.eq.s32.totalorder %s26, 1
      %p49 = por %p47, %p48
      %p51 = scmp.ne.s32.totalorder %s34, %s50
      %p52 = scmp.eq.s32.totalorder %s26, 0
      %p53 = por %p51, %p52
      %s55 = sadd.s32 %s54, 1
      %p58 = scmp.eq.s32.totalorder %s20, 1
      %p59 = scmp.ne.s32.totalorder %s54, %s56
      %p60 = scmp.eq.s32.totalorder %s20, 0
      %p61 = por %p59, %p60
      %p62 = scmp.ne.s32.totalorder %s54, %s56
      %p63 = scmp.eq.s32.totalorder %s25, 1
      %p64 = por %p62, %p63
      %p65 = scmp.ne.s32.totalorder %s56, %s57
      %p66 = scmp.eq.s32.totalorder %s25, 0
      %p67 = por %p65, %p66
      %p68 = scmp.ne.s32.totalorder %s56, %s57
      %p69 = scmp.eq.s32.totalorder %s26, 1
      %p70 = por %p68, %p69
      %p72 = scmp.ne.s32.totalorder %s57, %s71
      %p73 = scmp.eq.s32.totalorder %s26, 0
      %p74 = por %p72, %p73
      %s76 = sadd.s32 %s75, 1
      %p79 = scmp.eq.s32.totalorder %s20, 1
      %p80 = scmp.ne.s32.totalorder %s75, %s77
      %p81 = scmp.eq.s32.totalorder %s20, 0
      %p82 = por %p80, %p81
      %p83 = scmp.ne.s32.totalorder %s75, %s77
      %p84 = scmp.eq.s32.totalorder %s25, 1
      %p85 = por %p83, %p84
      %p86 = scmp.ne.s32.totalorder %s77, %s78
      %p87 = scmp.eq.s32.totalorder %s25, 0
      %p88 = por %p86, %p87
      %p89 = scmp.ne.s32.totalorder %s77, %s78
      %p90 = scmp.eq.s32.totalorder %s26, 1
      %p91 = por %p89, %p90
      %p93 = scmp.ne.s32.totalorder %s78, %s92
      %p94 = scmp.eq.s32.totalorder %s26, 0
      %p95 = por %p93, %p94
      %s97 = sadd.s32 %s96, 1
      %p100 = scmp.eq.s32.totalorder %s20, 1
      %p101 = scmp.ne.s32.totalorder %s96, %s98
      %p102 = scmp.eq.s32.totalorder %s20, 0
      %p103 = por %p101, %p102
      %p104 = scmp.ne.s32.totalorder %s96, %s98
      %p105 = scmp.eq.s32.totalorder %s25, 1
      %p106 = por %p104, %p105
      %p107 = scmp.ne.s32.totalorder %s98, %s99
      %p108 = scmp.eq.s32.totalorder %s25, 0
      %p109 = por %p107, %p108
      %p110 = scmp.ne.s32.totalorder %s98, %s99
      %p111 = scmp.eq.s32.totalorder %s26, 1
      %p112 = por %p110, %p111
      %p114 = scmp.ne.s32.totalorder %s99, %s113
      %p115 = scmp.eq.s32.totalorder %s26, 0
      %p116 = por %p114, %p115
      %s118 = sadd.s32 %s117, 1
      %p121 = scmp.eq.s32.totalorder %s20, 1
      %p122 = scmp.ne.s32.totalorder %s117, %s119
      %p123 = scmp.eq.s32.totalorder %s20, 0
      %p124 = por %p122, %p123
      %p125 = scmp.ne.s32.totalorder %s117, %s119
      %p126 = scmp.eq.s32.totalorder %s25, 1
      %p127 = por %p125, %p126
      %p128 = scmp.ne.s32.totalorder %s119, %s120
      %p129 = scmp.eq.s32.totalorder %s25, 0
      %p130 = por %p128, %p129
      %p131 = scmp.ne.s32.totalorder %s119, %s120
      %p132 = scmp.eq.s32.totalorder %s26, 1
      %p133 = por %p131, %p132
      %p135 = scmp.ne.s32.totalorder %s120, %s134
      %p136 = scmp.eq.s32.totalorder %s26, 0
      %p137 = por %p135, %p136
      %s139 = sadd.s32 %s138, 1
      %p142 = scmp.eq.s32.totalorder %s20, 1
      %p143 = scmp.ne.s32.totalorder %s138, %s140
      %p144 = scmp.eq.s32.totalorder %s20, 0
      %p145 = por %p143, %p144
      %p146 = scmp.ne.s32.totalorder %s138, %s140
      %p147 = scmp.eq.s32.totalorder %s25, 1
      %p148 = por %p146, %p147
      %p149 = scmp.ne.s32.totalorder %s140, %s141
      %p150 = scmp.eq.s32.totalorder %s25, 0
      %p151 = por %p149, %p150
      %p152 = scmp.ne.s32.totalorder %s140, %s141
      %p153 = scmp.eq.s32.totalorder %s26, 1
      %p154 = por %p152, %p153
      %p156 = scmp.ne.s32.totalorder %s141, %s155
      %p157 = scmp.eq.s32.totalorder %s26, 0
      %p158 = por %p156, %p157
      %s160 = sadd.s32 %s159, 1
      %p163 = scmp.eq.s32.totalorder %s20, 1
      %p164 = scmp.ne.s32.totalorder %s159, %s161
      %p165 = scmp.eq.s32.totalorder %s20, 0
      %p166 = por %p164, %p165
      %p167 = scmp.ne.s32.totalorder %s159, %s161
      %p168 = scmp.eq.s32.totalorder %s25, 1
      %p169 = por %p167, %p168
      %p170 = scmp.ne.s32.totalorder %s161, %s162
      %p171 = scmp.eq.s32.totalorder %s25, 0
      %p172 = por %p170, %p171
      %p173 = scmp.ne.s32.totalorder %s161, %s162
      %p174 = scmp.eq.s32.totalorder %s26, 1
      %p175 = por %p173, %p174
      %p177 = scmp.ne.s32.totalorder %s162, %s176
      %p178 = scmp.eq.s32.totalorder %s26, 0
      %p179 = por %p177, %p178
      %s181 = sadd.s32 %s180, 1
      %p184 = scmp.eq.s32.totalorder %s20, 1
      %p185 = scmp.ne.s32.totalorder %s180, %s182
      %p186 = scmp.eq.s32.totalorder %s20, 0
      %p187 = por %p185, %p186
      %p188 = scmp.ne.s32.totalorder %s180, %s182
      %p189 = scmp.eq.s32.totalorder %s25, 1
      %p190 = por %p188, %p189
      %p191 = scmp.ne.s32.totalorder %s182, %s183
      %p192 = scmp.eq.s32.totalorder %s25, 0
      %p193 = por %p191, %p192
      %p194 = scmp.ne.s32.totalorder %s182, %s183
      %p195 = scmp.eq.s32.totalorder %s26, 1
      %p196 = por %p194, %p195
      %p198 = scmp.ne.s32.totalorder %s183, %s197
      %p199 = scmp.eq.s32.totalorder %s26, 0
      %p200 = por %p198, %p199
      %s202 = sadd.s32 %s201, 1
      %p205 = scmp.eq.s32.totalorder %s20, 1
      %p206 = scmp.ne.s32.totalorder %s201, %s203
      %p207 = scmp.eq.s32.totalorder %s20, 0
      %p208 = por %p206, %p207
      %p209 = scmp.ne.s32.totalorder %s201, %s203
      %p210 = scmp.eq.s32.totalorder %s25, 1
      %p211 = por %p209, %p210
      %p212 = scmp.ne.s32.totalorder %s203, %s204
      %p213 = scmp.eq.s32.totalorder %s25, 0
      %p214 = por %p212, %p213
      %p215 = scmp.ne.s32.totalorder %s203, %s204
      %p216 = scmp.eq.s32.totalorder %s26, 1
      %p217 = por %p215, %p216
      %p219 = scmp.ne.s32.totalorder %s204, %s218
      %p220 = scmp.eq.s32.totalorder %s26, 0
      %p221 = por %p219, %p220
      %s223 = sadd.s32 %s222, 1
      %p226 = scmp.eq.s32.totalorder %s20, 1
      %p227 = scmp.ne.s32.totalorder %s222, %s224
      %p228 = scmp.eq.s32.totalorder %s20, 0
      %p229 = por %p227, %p228
      %p230 = scmp.ne.s32.totalorder %s222, %s224
      %p231 = scmp.eq.s32.totalorder %s25, 1
      %p232 = por %p230, %p231
      %p233 = scmp.ne.s32.totalorder %s224, %s225
      %p234 = scmp.eq.s32.totalorder %s25, 0
      %p235 = por %p233, %p234
      %p236 = scmp.ne.s32.totalorder %s224, %s225
      %p237 = scmp.eq.s32.totalorder %s26, 1
      %p238 = por %p236, %p237
      %p240 = scmp.ne.s32.totalorder %s225, %s239
      %p241 = scmp.eq.s32.totalorder %s26, 0
      %p242 = por %p240, %p241
      %s244 = sadd.s32 %s243, 1
      %p247 = scmp.eq.s32.totalorder %s20, 1
      %p248 = scmp.ne.s32.totalorder %s243, %s245
      %p249 = scmp.eq.s32.totalorder %s20, 0
      %p250 = por %p248, %p249
      %p251 = scmp.ne.s32.totalorder %s243, %s245
      %p252 = scmp.eq.s32.totalorder %s25, 1
      %p253 = por %p251, %p252
      %p254 = scmp.ne.s32.totalorder %s245, %s246
      %p255 = scmp.eq.s32.totalorder %s25, 0
      %p256 = por %p254, %p255
      %p257 = scmp.ne.s32.totalorder %s245, %s246
      %p258 = scmp.eq.s32.totalorder %s26, 1
      %p259 = por %p257, %p258
      %p261 = scmp.ne.s32.totalorder %s246, %s260
      %p262 = scmp.eq.s32.totalorder %s26, 0
      %p263 = por %p261, %p262
      %s264 = ssub.s32 %s20, %s27
      %p265 = scmp.eq.s32.totalorder %s264, 0
      %s267 = sadd.s32 %s266, 1
      %s268 = scalar_select %p265, %s266, %s267
      %p271 = pneg %p265
      %p272 = scmp.eq.s32.totalorder %s20, 1
      %p273 = por %p271, %p272
      %p274 = scmp.ne.s32.totalorder %s266, %s269
      %p275 = scmp.eq.s32.totalorder %s20, 0
      %p276 = por %p274, %p275
      %p277 = scmp.ne.s32.totalorder %s266, %s269
      %p278 = scmp.eq.s32.totalorder %s25, 1
      %p279 = por %p277, %p278
      %p280 = scmp.ne.s32.totalorder %s269, %s270
      %p281 = scmp.eq.s32.totalorder %s25, 0
      %p282 = por %p280, %p281
      %p283 = scmp.ne.s32.totalorder %s269, %s270
      %p284 = scmp.eq.s32.totalorder %s26, 1
      %p285 = por %p283, %p284
      %p287 = scmp.ne.s32.totalorder %s270, %s286
      %p288 = scmp.eq.s32.totalorder %s26, 0
      %p289 = por %p287, %p288
      %p290 = scmp.le.s32.totalorder 1, %s20
      %p291 = scmp.lt.s32.totalorder %s20, 3
      %p292 = pnand %p290, %p291
      %p293 = pneg %p292
      // Predicated region
      $region9: #{tpu_custom_call.1} parent=5 // pred_check
        _
      $region10: #{tpu_custom_call.1} parent=5 // pred_check_branch
        %295 = sbr.rel (%p292) target = $region12
      $region11: #{tpu_custom_call.1} parent=5 // pred_region
        %s296 = ssub.s32 %s20, 1
        // Predicated region
        $region13: #{tpu_custom_call.1} parent=11 // pred_check
          %p297 = pneg %p67
        $region14: #{tpu_custom_call.1} parent=11 // pred_check_branch
          %299 = sbr.rel (%p297) target = $region16
        $region15: #{tpu_custom_call.1} parent=11 // pred_region
          _
        $region16: #{tpu_custom_call.1} parent=11 // pred_fallthru
          _
        // Predicated region
        $region17: #{tpu_custom_call.1} parent=11 // pred_check
          %p300 = pneg %p88
        $region18: #{tpu_custom_call.1} parent=11 // pred_check_branch
          %302 = sbr.rel (%p300) target = $region20
        $region19: #{tpu_custom_call.1} parent=11 // pred_region
          _
        $region20: #{tpu_custom_call.1} parent=11 // pred_fallthru
          _
        // Predicated region
        $region21: #{tpu_custom_call.1} parent=11 // pred_check
          %p303 = pneg %p109
        $region22: #{tpu_custom_call.1} parent=11 // pred_check_branch
          %305 = sbr.rel (%p303) target = $region24
        $region23: #{tpu_custom_call.1} parent=11 // pred_region
          _
        $region24: #{tpu_custom_call.1} parent=11 // pred_fallthru
          _
        // Predicated region
        $region25: #{tpu_custom_call.1} parent=11 // pred_check
          %p306 = pneg %p130
        $region26: #{tpu_custom_call.1} parent=11 // pred_check_branch
          %308 = sbr.rel (%p306) target = $region28
        $region27: #{tpu_custom_call.1} parent=11 // pred_region
          _
        $region28: #{tpu_custom_call.1} parent=11 // pred_fallthru
          _
        // Predicated region
        $region29: #{tpu_custom_call.1} parent=11 // pred_check
          %p309 = pneg %p151
        $region30: #{tpu_custom_call.1} parent=11 // pred_check_branch
          %311 = sbr.rel (%p309) target = $region32
        $region31: #{tpu_custom_call.1} parent=11 // pred_region
          _
        $region32: #{tpu_custom_call.1} parent=11 // pred_fallthru
          _
        // Predicated region
        $region33: #{tpu_custom_call.1} parent=11 // pred_check
          %p312 = pneg %p172
        $region34: #{tpu_custom_call.1} parent=11 // pred_check_branch
          %314 = sbr.rel (%p312) target = $region36
        $region35: #{tpu_custom_call.1} parent=11 // pred_region
          _
        $region36: #{tpu_custom_call.1} parent=11 // pred_fallthru
          _
        // Predicated region
        $region37: #{tpu_custom_call.1} parent=11 // pred_check
          %p315 = pneg %p193
        $region38: #{tpu_custom_call.1} parent=11 // pred_check_branch
          %317 = sbr.rel (%p315) target = $region40
        $region39: #{tpu_custom_call.1} parent=11 // pred_region
          _
        $region40: #{tpu_custom_call.1} parent=11 // pred_fallthru
          _
        // Predicated region
        $region41: #{tpu_custom_call.1} parent=11 // pred_check
          %p318 = pneg %p214
        $region42: #{tpu_custom_call.1} parent=11 // pred_check_branch
          %320 = sbr.rel (%p318) target = $region44
        $region43: #{tpu_custom_call.1} parent=11 // pred_region
          _
        $region44: #{tpu_custom_call.1} parent=11 // pred_fallthru
          _
        // Predicated region
        $region45: #{tpu_custom_call.1} parent=11 // pred_check
          %p321 = pneg %p235
        $region46: #{tpu_custom_call.1} parent=11 // pred_check_branch
          %323 = sbr.rel (%p321) target = $region48
        $region47: #{tpu_custom_call.1} parent=11 // pred_region
          _
        $region48: #{tpu_custom_call.1} parent=11 // pred_fallthru
          _
        // Predicated region
        $region49: #{tpu_custom_call.1} parent=11 // pred_check
          %p324 = pneg %p256
        $region50: #{tpu_custom_call.1} parent=11 // pred_check_branch
          %326 = sbr.rel (%p324) target = $region52
        $region51: #{tpu_custom_call.1} parent=11 // pred_region
          _
        $region52: #{tpu_custom_call.1} parent=11 // pred_fallthru
          _
      $region12: #{tpu_custom_call.1} parent=5 // pred_fallthru
        _
      %p327 = scmp.lt.s32.totalorder %s20, 2
      // Predicated region
      $region53: #{tpu_custom_call.1} parent=5 // pred_check
        %p328 = pneg %p327
      $region54: #{tpu_custom_call.1} parent=5 // pred_check_branch
        %330 = sbr.rel (%p328) target = $region56
      $region55: #{tpu_custom_call.1} parent=5 // pred_region
        // Predicated region
        $region57: #{tpu_custom_call.1} parent=55 // pred_check
          %p331 = pneg %p40
        $region58: #{tpu_custom_call.1} parent=55 // pred_check_branch
          %333 = sbr.rel (%p331) target = $region60
        $region59: #{tpu_custom_call.1} parent=55 // pred_region
          %s334 = smul.u32 6, %s20
          %s335 = ssub.s32 7, %s334
          %p336 = scmp.lt.s32.totalorder %s335, 6
          %s337 = scalar_select %p336, %s335, 6
          %s338 = smul.u32 8, %s337
          %p339 = scmp.lt.s32.totalorder %s334, 6
          %s340 = scalar_select %p339, %s334, 6
          %s341 = smul.addr %s340, 8
          %s342 = scalar_lea.vmem %s0, %s341
          %s343 = smul.u32 6, %s20
          %s344 = ssub.s32 7, %s343
          %p345 = scmp.lt.s32.totalorder %s344, 6
          %s346 = scalar_select %p345, %s344, 6
          %s347 = smul.u32 8, %s346
        $region60: #{tpu_custom_call.1} parent=55 // pred_fallthru
          _
      $region56: #{tpu_custom_call.1} parent=5 // pred_fallthru
        _
      %p348 = scmp.le.s32.totalorder 1, %s20
      %p349 = scmp.lt.s32.totalorder %s20, 3
      %p350 = pnand %p348, %p349
      %p351 = pneg %p350
      // Predicated region
      $region61: #{tpu_custom_call.1} parent=5 // pred_check
        _
      $region62: #{tpu_custom_call.1} parent=5 // pred_check_branch
        %353 = sbr.rel (%p350) target = $region64
      $region63: #{tpu_custom_call.1} parent=5 // pred_region
        %s354 = ssub.s32 %s20, 1
        %s355 = smul.u32 6, %s25
        %s356 = ssub.s32 7, %s355
        %p357 = scmp.lt.s32.totalorder %s356, 6
        %s358 = scalar_select %p357, %s356, 6
        %s359 = smul.u32 8, %s358
        %p360 = scmp.lt.s32.totalorder %s355, 6
        %s361 = scalar_select %p360, %s355, 6
        %s362 = smul.addr %s361, 8
        %s363 = scalar_lea.vmem %s0, %s362
        %p364 = pneg %p46
        %p365 = pneg %p43
        %p366 = pneg %p67
        %p367 = pneg %p64
        %p368 = pneg %p88
        %p369 = pneg %p85
        %p370 = pneg %p109
        %p371 = pneg %p106
        %p372 = pneg %p130
        %p373 = pneg %p127
        %p374 = pneg %p151
        %p375 = pneg %p148
        %p376 = pneg %p172
        %p377 = pneg %p169
        %p378 = pneg %p193
        %p379 = pneg %p190
        %p380 = pneg %p214
        %p381 = pneg %p211
        %p382 = pneg %p235
        %p383 = pneg %p232
        %p384 = pneg %p256
        %p385 = pneg %p253
        %p386 = pneg %p282
        %p387 = pneg %p279
        %s388 = sand.u32 %s269, 1
        %s389 = scalar_lea.sflag [#allocation3], %s388
        %s390 = sand.u32 %s269, 1
        %s391 = smul.addr %s390, 48
        %s392 = scalar_lea.vmem [#allocation2], %s391
        %s393 = smul.u32 6, %s25
        %s394 = ssub.s32 7, %s393
        %p395 = scmp.lt.s32.totalorder %s394, 6
        %s396 = scalar_select %p395, %s394, 6
        %s397 = smul.u32 8, %s396
        %p398 = scmp.lt.s32.totalorder %s393, 6
        %s399 = scalar_select %p398, %s393, 6
        %s400 = smul.addr %s399, 8
        %s401 = scalar_lea.vmem %s0, %s400
        %s402 = smul.u32 6, %s25
        %s403 = ssub.s32 7, %s402
        %p404 = scmp.lt.s32.totalorder %s403, 6
        %s405 = scalar_select %p404, %s403, 6
        %s406 = smul.u32 8, %s405
        %s407 = smul.u32 6, %s25
        %s408 = ssub.s32 7, %s407
        %p409 = scmp.lt.s32.totalorder %s408, 6
        %s410 = scalar_select %p409, %s408, 6
        %s411 = smul.u32 8, %s410
        %v412 = vld [vmem:[%s401] sm:$0xff]
        %v413 = vld [vmem:[%s401 + $0x8] sm:$0xff]
        %v414 = vld [vmem:[%s401 + $0x10] sm:$0xff]
        %v415 = vld [vmem:[%s401 + $0x18] sm:$0xff]
        %v416 = vld [vmem:[%s401 + $0x20] sm:$0xff]
        %v417 = vld [vmem:[%s401 + $0x28] sm:$0xff]
        %v418 = vld [vmem:[%s9] sm:$0xff]
        %v419 = vld [vmem:[%s9 + $0x8] sm:$0xff]
        %v420 = vld [vmem:[%s9 + $0x10] sm:$0xff]
        %v421 = vld [vmem:[%s9 + $0x18] sm:$0xff]
        %v422 = vld [vmem:[%s9 + $0x20] sm:$0xff]
        %v423 = vld [vmem:[%s9 + $0x28] sm:$0xff]
        %v424 = vld [vmem:[%s9 + $0x30] sm:$0xff]
        %v425 = vld [vmem:[%s9 + $0x38] sm:$0xff]
        %v426 = vld [vmem:[%s9 + $0x40] sm:$0xff]
        %v427 = vld [vmem:[%s9 + $0x48] sm:$0xff]
        %v428 = vld [vmem:[%s9 + $0x50] sm:$0xff]
        %v429 = vld [vmem:[%s9 + $0x58] sm:$0xff]
        %v430 = vld [vmem:[%s9 + $0x60] sm:$0xff]
        %v431 = vld [vmem:[%s9 + $0x68] sm:$0xff]
        %v432 = vld [vmem:[%s9 + $0x70] sm:$0xff]
        %v433 = vld [vmem:[%s9 + $0x78] sm:$0xff]
        %v434 = vld [vmem:[%s10] sm:$0xff]
        %v435 = vld [vmem:[%s10 + $0x8] sm:$0xff]
        %v436 = vld [vmem:[%s10 + $0x10] sm:$0xff]
        %v437 = vld [vmem:[%s10 + $0x18] sm:$0xff]
        %v438 = vld [vmem:[%s1] sm:$0xff]
        %v439 = vld [vmem:[%s1 + $0x8] sm:$0xff]
        %v440 = vld [vmem:[%s1 + $0x10] sm:$0xff]
        %v441 = vld [vmem:[%s1 + $0x18] sm:$0xff]
        %v442 = vld [vmem:[%s1 + $0x20] sm:$0xff]
        %v443 = vld [vmem:[%s1 + $0x28] sm:$0xff]
        %v444 = vld [vmem:[%s1 + $0x30] sm:$0xff]
        %v445 = vld [vmem:[%s1 + $0x38] sm:$0xff]
        %v446 = vld [vmem:[%s1 + $0x40] sm:$0xff]
        %v447 = vld [vmem:[%s1 + $0x48] sm:$0xff]
        %v448 = vld [vmem:[%s1 + $0x50] sm:$0xff]
        %v449 = vld [vmem:[%s1 + $0x58] sm:$0xff]
        %v450 = vld [vmem:[%s1 + $0x60] sm:$0xff]
        %v451 = vld [vmem:[%s1 + $0x68] sm:$0xff]
        %v452 = vld [vmem:[%s1 + $0x70] sm:$0xff]
        %v453 = vld [vmem:[%s1 + $0x78] sm:$0xff]
        %454 = vmatpush.msra.mxu0 %v453
        %455 = vmatpush.msra.mxu0 %v452
        %456 = vmatpush.msra.mxu0 %v451
        %457 = vmatpush.msra.mxu0 %v450
        %458 = vmatpush.msra.mxu0 %v449
        %459 = vmatpush.msra.mxu0 %v448
        %460 = vmatpush.msra.mxu0 %v447
        %461 = vmatpush.msra.mxu0 %v446
        %462 = vmatpush.msra.mxu0 %v445
        %463 = vmatpush.msra.mxu0 %v444
        %464 = vmatpush.msra.mxu0 %v443
        %465 = vmatpush.msra.mxu0 %v442
        %466 = vmatpush.msra.mxu0 %v441
        %467 = vmatpush.msra.mxu0 %v440
        %468 = vmatpush.msra.mxu0 %v439
        %469 = vmatpush.msra.mxu0 %v438
        %470 = vmatmul.f32.gmra.mxu0 %v412
        %v471 = vpop.f32.mrf.mxu0
        %v472 = vadd.f32 0.0, %v471
        %473 = vmatmul.f32.gmra.mxu0 %v413
        %v474 = vpop.f32.mrf.mxu0
        %v475 = vadd.f32 0.0, %v474
        %476 = vmatmul.f32.gmra.mxu0 %v414
        %v477 = vpop.f32.mrf.mxu0
        %v478 = vadd.f32 0.0, %v477
        %479 = vmatmul.f32.gmra.mxu0 %v415
        %v480 = vpop.f32.mrf.mxu0
        %v481 = vadd.f32 0.0, %v480
        %482 = vmatmul.f32.gmra.mxu0 %v416
        %v483 = vpop.f32.mrf.mxu0
        %v484 = vadd.f32 0.0, %v483
        %485 = vmatmul.f32.gmra.mxu0 %v417
        %v486 = vpop.f32.mrf.mxu0
        %v487 = vadd.f32 0.0, %v486
        %488 = vdwg.mxu0
        %v489 = vld [vmem:[%s2] sm:$0xff]
        %v490 = vld [vmem:[%s2 + $0x8] sm:$0xff]
        %v491 = vld [vmem:[%s2 + $0x10] sm:$0xff]
        %v492 = vld [vmem:[%s2 + $0x18] sm:$0xff]
        %v493 = vld [vmem:[%s2 + $0x20] sm:$0xff]
        %v494 = vld [vmem:[%s2 + $0x28] sm:$0xff]
        %v495 = vld [vmem:[%s2 + $0x30] sm:$0xff]
        %v496 = vld [vmem:[%s2 + $0x38] sm:$0xff]
        %v497 = vld [vmem:[%s2 + $0x40] sm:$0xff]
        %v498 = vld [vmem:[%s2 + $0x48] sm:$0xff]
        %v499 = vld [vmem:[%s2 + $0x50] sm:$0xff]
        %v500 = vld [vmem:[%s2 + $0x58] sm:$0xff]
        %v501 = vld [vmem:[%s2 + $0x60] sm:$0xff]
        %v502 = vld [vmem:[%s2 + $0x68] sm:$0xff]
        %v503 = vld [vmem:[%s2 + $0x70] sm:$0xff]
        %v504 = vld [vmem:[%s2 + $0x78] sm:$0xff]
        %505 = vmatpush.msra.mxu0 %v504
        %506 = vmatpush.msra.mxu0 %v503
        %507 = vmatpush.msra.mxu0 %v502
        %508 = vmatpush.msra.mxu0 %v501
        %509 = vmatpush.msra.mxu0 %v500
        %510 = vmatpush.msra.mxu0 %v499
        %511 = vmatpush.msra.mxu0 %v498
        %512 = vmatpush.msra.mxu0 %v497
        %513 = vmatpush.msra.mxu0 %v496
        %514 = vmatpush.msra.mxu0 %v495
        %515 = vmatpush.msra.mxu0 %v494
        %516 = vmatpush.msra.mxu0 %v493
        %517 = vmatpush.msra.mxu0 %v492
        %518 = vmatpush.msra.mxu0 %v491
        %519 = vmatpush.msra.mxu0 %v490
        %520 = vmatpush.msra.mxu0 %v489
        %521 = vmatmul.f32.gmra.mxu0 %v412
        %v522 = vpop.f32.mrf.mxu0
        %v523 = vadd.f32 0.0, %v522
        %524 = vmatmul.f32.gmra.mxu0 %v413
        %v525 = vpop.f32.mrf.mxu0
        %v526 = vadd.f32 0.0, %v525
        %527 = vmatmul.f32.gmra.mxu0 %v414
        %v528 = vpop.f32.mrf.mxu0
        %v529 = vadd.f32 0.0, %v528
        %530 = vmatmul.f32.gmra.mxu0 %v415
        %v531 = vpop.f32.mrf.mxu0
        %v532 = vadd.f32 0.0, %v531
        %533 = vmatmul.f32.gmra.mxu0 %v416
        %v534 = vpop.f32.mrf.mxu0
        %v535 = vadd.f32 0.0, %v534
        %536 = vmatmul.f32.gmra.mxu0 %v417
        %v537 = vpop.f32.mrf.mxu0
        %v538 = vadd.f32 0.0, %v537
        %539 = vdwg.mxu0
        %v540 = vmul.f32 %v523, 0.25
        %v541 = vmul.f32 %v526, 0.25
        %v542 = vmul.f32 %v529, 0.25
        %v543 = vmul.f32 %v532, 0.25
        %v544 = vmul.f32 %v535, 0.25
        %v545 = vmul.f32 %v538, 0.25
        %vm546 = vcmask 261120
        %v548 = vsel %vm546, %v540, 0
        %v551 = vsel %vm546, %v541, 0
        %v554 = vsel %vm546, %v542, 0
        %v557 = vsel %vm546, %v543, 0
        %v560 = vsel %vm546, %v544, 0
        %v563 = vsel %vm546, %v545, 0
        %565 = vmatpush.msra.mxu0 0.0
        %566 = vmatpush.msra.mxu0 0.0
        %567 = vmatpush.msra.mxu0 0.0
        %568 = vmatpush.msra.mxu0 0.0
        %569 = vmatpush.msra.mxu0 0.0
        %570 = vmatpush.msra.mxu0 0.0
        %571 = vmatpush.msra.mxu0 0.0
        %572 = vmatpush.msra.mxu0 0.0
        %573 = vmatpush.msra.mxu0 0.0
        %574 = vmatpush.msra.mxu0 0.0
        %575 = vmatpush.msra.mxu0 0.0
        %576 = vmatpush.msra.mxu0 0.0
        %577 = vmatpush.msra.mxu0 %v437
        %578 = vmatpush.msra.mxu0 %v436
        %579 = vmatpush.msra.mxu0 %v435
        %580 = vmatpush.msra.mxu0 %v434
        %581 = vmatmul.f32.gmra.mxu0 %v548
        %v582 = vpop.f32.mrf.mxu0
        %v583 = vadd.f32 0.0, %v582
        %584 = vmatmul.f32.gmra.mxu0 %v551
        %v585 = vpop.f32.mrf.mxu0
        %v586 = vadd.f32 0.0, %v585
        %587 = vmatmul.f32.gmra.mxu0 %v554
        %v588 = vpop.f32.mrf.mxu0
        %v589 = vadd.f32 0.0, %v588
        %590 = vmatmul.f32.gmra.mxu0 %v557
        %v591 = vpop.f32.mrf.mxu0
        %v592 = vadd.f32 0.0, %v591
        %593 = vmatmul.f32.gmra.mxu0 %v560
        %v594 = vpop.f32.mrf.mxu0
        %v595 = vadd.f32 0.0, %v594
        %596 = vmatmul.f32.gmra.mxu0 %v563
        %v597 = vpop.f32.mrf.mxu0
        %v598 = vadd.f32 0.0, %v597
        %599 = vdwg.mxu0
        %v600 = vsub.f32 %v472, %v583
        %v601 = vsub.f32 %v475, %v586
        %v602 = vsub.f32 %v478, %v589
        %v603 = vsub.f32 %v481, %v592
        %v604 = vsub.f32 %v484, %v595
        %v605 = vsub.f32 %v487, %v598
        %v606 = vmul.f32 %v600, %v600
        %v607 = vmul.f32 %v601, %v601
        %v608 = vmul.f32 %v602, %v602
        %v609 = vmul.f32 %v603, %v603
        %v610 = vmul.f32 %v604, %v604
        %v611 = vmul.f32 %v605, %v605
        %612 = vmatpush.msra.mxu0 %v433
        %613 = vmatpush.msra.mxu0 %v432
        %614 = vmatpush.msra.mxu0 %v431
        %615 = vmatpush.msra.mxu0 %v430
        %616 = vmatpush.msra.mxu0 %v429
        %617 = vmatpush.msra.mxu0 %v428
        %618 = vmatpush.msra.mxu0 %v427
        %619 = vmatpush.msra.mxu0 %v426
        %620 = vmatpush.msra.mxu0 %v425
        %621 = vmatpush.msra.mxu0 %v424
        %622 = vmatpush.msra.mxu0 %v423
        %623 = vmatpush.msra.mxu0 %v422
        %624 = vmatpush.msra.mxu0 %v421
        %625 = vmatpush.msra.mxu0 %v420
        %626 = vmatpush.msra.mxu0 %v419
        %627 = vmatpush.msra.mxu0 %v418
        %628 = vmatmul.f32.gmra.mxu0 %v606
        %v629 = vpop.f32.mrf.mxu0
        %v630 = vadd.f32 0.0, %v629
        %631 = vmatmul.f32.gmra.mxu0 %v607
        %v632 = vpop.f32.mrf.mxu0
        %v633 = vadd.f32 0.0, %v632
        %634 = vmatmul.f32.gmra.mxu0 %v608
        %v635 = vpop.f32.mrf.mxu0
        %v636 = vadd.f32 0.0, %v635
        %637 = vmatmul.f32.gmra.mxu0 %v609
        %v638 = vpop.f32.mrf.mxu0
        %v639 = vadd.f32 0.0, %v638
        %640 = vmatmul.f32.gmra.mxu0 %v610
        %v641 = vpop.f32.mrf.mxu0
        %v642 = vadd.f32 0.0, %v641
        %643 = vmatmul.f32.gmra.mxu0 %v611
        %v644 = vpop.f32.mrf.mxu0
        %v645 = vadd.f32 0.0, %v644
        %646 = vdwg.mxu0
        %v647 = vmul.f32 %v630, 0.25
        %v648 = vmul.f32 %v633, 0.25
        %v649 = vmul.f32 %v636, 0.25
        %v650 = vmul.f32 %v639, 0.25
        %v651 = vmul.f32 %v642, 0.25
        %v652 = vmul.f32 %v645, 0.25
        %v653 = vmax.f32 %v647, 0.0
        %v654 = vmax.f32 %v648, 0.0
        %v655 = vmax.f32 %v649, 0.0
        %v656 = vmax.f32 %v650, 0.0
        %v657 = vmax.f32 %v651, 0.0
        %v658 = vmax.f32 %v652, 0.0
        %v659 = vadd.f32 %v653, 1e-05
        %v660 = vadd.f32 %v654, 1e-05
        %v661 = vadd.f32 %v655, 1e-05
        %v662 = vadd.f32 %v656, 1e-05
        %v663 = vadd.f32 %v657, 1e-05
        %v664 = vadd.f32 %v658, 1e-05
        %v665 = vrsqrt.pop %v659
        %v666 = vmul.f32 %v665, %v659
        %v667 = vmul.f32 %v666, %v665
        %v668 = vmul.f32 0.5, %v667
        %v669 = vsub.f32 1.5, %v668
        %v670 = vmul.f32 %v665, %v669
        %vm671 = vweird.f32 %v659
        %vm672 = vweird.f32 %v665
        %vm673 = vmor %vm671, %vm672
        %v674 = vsel %vm673, %v665, %v670
        %v675 = vrsqrt.pop %v660
        %v676 = vmul.f32 %v675, %v660
        %v677 = vmul.f32 %v676, %v675
        %v678 = vmul.f32 0.5, %v677
        %v679 = vsub.f32 1.5, %v678
        %v680 = vmul.f32 %v675, %v679
        %vm681 = vweird.f32 %v660
        %vm682 = vweird.f32 %v675
        %vm683 = vmor %vm681, %vm682
        %v684 = vsel %vm683, %v675, %v680
        %v685 = vrsqrt.pop %v661
        %v686 = vmul.f32 %v685, %v661
        %v687 = vmul.f32 %v686, %v685
        %v688 = vmul.f32 0.5, %v687
        %v689 = vsub.f32 1.5, %v688
        %v690 = vmul.f32 %v685, %v689
        %vm691 = vweird.f32 %v661
        %vm692 = vweird.f32 %v685
        %vm693 = vmor %vm691, %vm692
        %v694 = vsel %vm693, %v685, %v690
        %v695 = vrsqrt.pop %v662
        %v696 = vmul.f32 %v695, %v662
        %v697 = vmul.f32 %v696, %v695
        %v698 = vmul.f32 0.5, %v697
        %v699 = vsub.f32 1.5, %v698
        %v700 = vmul.f32 %v695, %v699
        %vm701 = vweird.f32 %v662
        %vm702 = vweird.f32 %v695
        %vm703 = vmor %vm701, %vm702
        %v704 = vsel %vm703, %v695, %v700
        %v705 = vrsqrt.pop %v663
        %v706 = vmul.f32 %v705, %v663
        %v707 = vmul.f32 %v706, %v705
        %v708 = vmul.f32 0.5, %v707
        %v709 = vsub.f32 1.5, %v708
        %v710 = vmul.f32 %v705, %v709
        %vm711 = vweird.f32 %v663
        %vm712 = vweird.f32 %v705
        %vm713 = vmor %vm711, %vm712
        %v714 = vsel %vm713, %v705, %v710
        %v715 = vrsqrt.pop %v664
        %v716 = vmul.f32 %v715, %v664
        %v717 = vmul.f32 %v716, %v715
        %v718 = vmul.f32 0.5, %v717
        %v719 = vsub.f32 1.5, %v718
        %v720 = vmul.f32 %v715, %v719
        %vm721 = vweird.f32 %v664
        %vm722 = vweird.f32 %v715
        %vm723 = vmor %vm721, %vm722
        %v724 = vsel %vm723, %v715, %v720
        %v726 = vsel %vm546, %v674, 0
        %v729 = vsel %vm546, %v684, 0
        %v732 = vsel %vm546, %v694, 0
        %v735 = vsel %vm546, %v704, 0
        %v738 = vsel %vm546, %v714, 0
        %v741 = vsel %vm546, %v724, 0
        %743 = vmatpush.msra.mxu0 0.0
        %744 = vmatpush.msra.mxu0 0.0
        %745 = vmatpush.msra.mxu0 0.0
        %746 = vmatpush.msra.mxu0 0.0
        %747 = vmatpush.msra.mxu0 0.0
        %748 = vmatpush.msra.mxu0 0.0
        %749 = vmatpush.msra.mxu0 0.0
        %750 = vmatpush.msra.mxu0 0.0
        %751 = vmatpush.msra.mxu0 0.0
        %752 = vmatpush.msra.mxu0 0.0
        %753 = vmatpush.msra.mxu0 0.0
        %754 = vmatpush.msra.mxu0 0.0
        %755 = vmatpush.msra.mxu0 %v437
        %756 = vmatpush.msra.mxu0 %v436
        %757 = vmatpush.msra.mxu0 %v435
        %758 = vmatpush.msra.mxu0 %v434
        %759 = vmatmul.f32.gmra.mxu0 %v726
        %v760 = vpop.f32.mrf.mxu0
        %v761 = vadd.f32 0.0, %v760
        %762 = vmatmul.f32.gmra.mxu0 %v729
        %v763 = vpop.f32.mrf.mxu0
        %v764 = vadd.f32 0.0, %v763
        %765 = vmatmul.f32.gmra.mxu0 %v732
        %v766 = vpop.f32.mrf.mxu0
        %v767 = vadd.f32 0.0, %v766
        %768 = vmatmul.f32.gmra.mxu0 %v735
        %v769 = vpop.f32.mrf.mxu0
        %v770 = vadd.f32 0.0, %v769
        %771 = vmatmul.f32.gmra.mxu0 %v738
        %v772 = vpop.f32.mrf.mxu0
        %v773 = vadd.f32 0.0, %v772
        %774 = vmatmul.f32.gmra.mxu0 %v741
        %v775 = vpop.f32.mrf.mxu0
        %v776 = vadd.f32 0.0, %v775
        %777 = vdwg.mxu0
        %v778 = vmul.f32 %v600, %v761
        %v779 = vmul.f32 %v601, %v764
        %v780 = vmul.f32 %v602, %v767
        %v781 = vmul.f32 %v603, %v770
        %v782 = vmul.f32 %v604, %v773
        %v783 = vmul.f32 %v605, %v776
        %v784 = vld [vmem:[%s3] sm:$0x1]
        %v786 = vperm.slane %v784, 0
        %v788 = vmul.f32 %v778, %v786
        %v789 = vmul.f32 %v779, %v786
        %v790 = vmul.f32 %v780, %v786
        %v791 = vmul.f32 %v781, %v786
        %v792 = vmul.f32 %v782, %v786
        %v793 = vmul.f32 %v783, %v786
        %v794 = vld [vmem:[%s4] sm:$0x1]
        %v796 = vperm.slane %v794, 0
        %v798 = vadd.f32 %v788, %v796
        %v799 = vadd.f32 %v789, %v796
        %v800 = vadd.f32 %v790, %v796
        %v801 = vadd.f32 %v791, %v796
        %v802 = vadd.f32 %v792, %v796
        %v803 = vadd.f32 %v793, %v796
        %v804 = vmax.f32 %v798, 0.0
        %v805 = vmax.f32 %v799, 0.0
        %v806 = vmax.f32 %v800, 0.0
        %v807 = vmax.f32 %v801, 0.0
        %v808 = vmax.f32 %v802, 0.0
        %v809 = vmax.f32 %v803, 0.0
        %v810 = vld [vmem:[%s5] sm:$0xff]
        %v811 = vld [vmem:[%s5 + $0x8] sm:$0xff]
        %v812 = vld [vmem:[%s5 + $0x10] sm:$0xff]
        %v813 = vld [vmem:[%s5 + $0x18] sm:$0xff]
        %v814 = vld [vmem:[%s5 + $0x20] sm:$0xff]
        %v815 = vld [vmem:[%s5 + $0x28] sm:$0xff]
        %v816 = vld [vmem:[%s5 + $0x30] sm:$0xff]
        %v817 = vld [vmem:[%s5 + $0x38] sm:$0xff]
        %v818 = vld [vmem:[%s5 + $0x40] sm:$0xff]
        %v819 = vld [vmem:[%s5 + $0x48] sm:$0xff]
        %v820 = vld [vmem:[%s5 + $0x50] sm:$0xff]
        %v821 = vld [vmem:[%s5 + $0x58] sm:$0xff]
        %v822 = vld [vmem:[%s5 + $0x60] sm:$0xff]
        %v823 = vld [vmem:[%s5 + $0x68] sm:$0xff]
        %v824 = vld [vmem:[%s5 + $0x70] sm:$0xff]
        %v825 = vld [vmem:[%s5 + $0x78] sm:$0xff]
        %826 = vmatpush.msra.mxu0 %v825
        %827 = vmatpush.msra.mxu0 %v824
        %828 = vmatpush.msra.mxu0 %v823
        %829 = vmatpush.msra.mxu0 %v822
        %830 = vmatpush.msra.mxu0 %v821
        %831 = vmatpush.msra.mxu0 %v820
        %832 = vmatpush.msra.mxu0 %v819
        %833 = vmatpush.msra.mxu0 %v818
        %834 = vmatpush.msra.mxu0 %v817
        %835 = vmatpush.msra.mxu0 %v816
        %836 = vmatpush.msra.mxu0 %v815
        %837 = vmatpush.msra.mxu0 %v814
        %838 = vmatpush.msra.mxu0 %v813
        %839 = vmatpush.msra.mxu0 %v812
        %840 = vmatpush.msra.mxu0 %v811
        %841 = vmatpush.msra.mxu0 %v810
        %842 = vmatmul.f32.gmra.mxu0 %v804
        %v843 = vpop.f32.mrf.mxu0
        %v844 = vadd.f32 0.0, %v843
        %845 = vmatmul.f32.gmra.mxu0 %v805
        %v846 = vpop.f32.mrf.mxu0
        %v847 = vadd.f32 0.0, %v846
        %848 = vmatmul.f32.gmra.mxu0 %v806
        %v849 = vpop.f32.mrf.mxu0
        %v850 = vadd.f32 0.0, %v849
        %851 = vmatmul.f32.gmra.mxu0 %v807
        %v852 = vpop.f32.mrf.mxu0
        %v853 = vadd.f32 0.0, %v852
        %854 = vmatmul.f32.gmra.mxu0 %v808
        %v855 = vpop.f32.mrf.mxu0
        %v856 = vadd.f32 0.0, %v855
        %857 = vmatmul.f32.gmra.mxu0 %v809
        %v858 = vpop.f32.mrf.mxu0
        %v859 = vadd.f32 0.0, %v858
        %860 = vdwg.mxu0
        %v861 = vld [vmem:[%s6] sm:$0xff]
        %v862 = vld [vmem:[%s6 + $0x8] sm:$0xff]
        %v863 = vld [vmem:[%s6 + $0x10] sm:$0xff]
        %v864 = vld [vmem:[%s6 + $0x18] sm:$0xff]
        %v865 = vld [vmem:[%s6 + $0x20] sm:$0xff]
        %v866 = vld [vmem:[%s6 + $0x28] sm:$0xff]
        %v867 = vld [vmem:[%s6 + $0x30] sm:$0xff]
        %v868 = vld [vmem:[%s6 + $0x38] sm:$0xff]
        %v869 = vld [vmem:[%s6 + $0x40] sm:$0xff]
        %v870 = vld [vmem:[%s6 + $0x48] sm:$0xff]
        %v871 = vld [vmem:[%s6 + $0x50] sm:$0xff]
        %v872 = vld [vmem:[%s6 + $0x58] sm:$0xff]
        %v873 = vld [vmem:[%s6 + $0x60] sm:$0xff]
        %v874 = vld [vmem:[%s6 + $0x68] sm:$0xff]
        %v875 = vld [vmem:[%s6 + $0x70] sm:$0xff]
        %v876 = vld [vmem:[%s6 + $0x78] sm:$0xff]
        %877 = vmatpush.msra.mxu0 %v876
        %878 = vmatpush.msra.mxu0 %v875
        %879 = vmatpush.msra.mxu0 %v874
        %880 = vmatpush.msra.mxu0 %v873
        %881 = vmatpush.msra.mxu0 %v872
        %882 = vmatpush.msra.mxu0 %v871
        %883 = vmatpush.msra.mxu0 %v870
        %884 = vmatpush.msra.mxu0 %v869
        %885 = vmatpush.msra.mxu0 %v868
        %886 = vmatpush.msra.mxu0 %v867
        %887 = vmatpush.msra.mxu0 %v866
        %888 = vmatpush.msra.mxu0 %v865
        %889 = vmatpush.msra.mxu0 %v864
        %890 = vmatpush.msra.mxu0 %v863
        %891 = vmatpush.msra.mxu0 %v862
        %892 = vmatpush.msra.mxu0 %v861
        %893 = vmatmul.f32.gmra.mxu0 %v804
        %v894 = vpop.f32.mrf.mxu0
        %v895 = vadd.f32 0.0, %v894
        %896 = vmatmul.f32.gmra.mxu0 %v805
        %v897 = vpop.f32.mrf.mxu0
        %v898 = vadd.f32 0.0, %v897
        %899 = vmatmul.f32.gmra.mxu0 %v806
        %v900 = vpop.f32.mrf.mxu0
        %v901 = vadd.f32 0.0, %v900
        %902 = vmatmul.f32.gmra.mxu0 %v807
        %v903 = vpop.f32.mrf.mxu0
        %v904 = vadd.f32 0.0, %v903
        %905 = vmatmul.f32.gmra.mxu0 %v808
        %v906 = vpop.f32.mrf.mxu0
        %v907 = vadd.f32 0.0, %v906
        %908 = vmatmul.f32.gmra.mxu0 %v809
        %v909 = vpop.f32.mrf.mxu0
        %v910 = vadd.f32 0.0, %v909
        %911 = vdwg.mxu0
        %v912 = vmul.f32 %v895, 0.25
        %v913 = vmul.f32 %v898, 0.25
        %v914 = vmul.f32 %v901, 0.25
        %v915 = vmul.f32 %v904, 0.25
        %v916 = vmul.f32 %v907, 0.25
        %v917 = vmul.f32 %v910, 0.25
        %v919 = vsel %vm546, %v912, 0
        %v922 = vsel %vm546, %v913, 0
        %v925 = vsel %vm546, %v914, 0
        %v928 = vsel %vm546, %v915, 0
        %v931 = vsel %vm546, %v916, 0
        %v934 = vsel %vm546, %v917, 0
        %936 = vmatpush.msra.mxu0 0.0
        %937 = vmatpush.msra.mxu0 0.0
        %938 = vmatpush.msra.mxu0 0.0
        %939 = vmatpush.msra.mxu0 0.0
        %940 = vmatpush.msra.mxu0 0.0
        %941 = vmatpush.msra.mxu0 0.0
        %942 = vmatpush.msra.mxu0 0.0
        %943 = vmatpush.msra.mxu0 0.0
        %944 = vmatpush.msra.mxu0 0.0
        %945 = vmatpush.msra.mxu0 0.0
        %946 = vmatpush.msra.mxu0 0.0
        %947 = vmatpush.msra.mxu0 0.0
        %948 = vmatpush.msra.mxu0 %v437
        %949 = vmatpush.msra.mxu0 %v436
        %950 = vmatpush.msra.mxu0 %v435
        %951 = vmatpush.msra.mxu0 %v434
        %952 = vmatmul.f32.gmra.mxu0 %v919
        %v953 = vpop.f32.mrf.mxu0
        %v954 = vadd.f32 0.0, %v953
        %955 = vmatmul.f32.gmra.mxu0 %v922
        %v956 = vpop.f32.mrf.mxu0
        %v957 = vadd.f32 0.0, %v956
        %958 = vmatmul.f32.gmra.mxu0 %v925
        %v959 = vpop.f32.mrf.mxu0
        %v960 = vadd.f32 0.0, %v959
        %961 = vmatmul.f32.gmra.mxu0 %v928
        %v962 = vpop.f32.mrf.mxu0
        %v963 = vadd.f32 0.0, %v962
        %964 = vmatmul.f32.gmra.mxu0 %v931
        %v965 = vpop.f32.mrf.mxu0
        %v966 = vadd.f32 0.0, %v965
        %967 = vmatmul.f32.gmra.mxu0 %v934
        %v968 = vpop.f32.mrf.mxu0
        %v969 = vadd.f32 0.0, %v968
        %970 = vdwg.mxu0
        %v971 = vsub.f32 %v844, %v954
        %v972 = vsub.f32 %v847, %v957
        %v973 = vsub.f32 %v850, %v960
        %v974 = vsub.f32 %v853, %v963
        %v975 = vsub.f32 %v856, %v966
        %v976 = vsub.f32 %v859, %v969
        %v977 = vmul.f32 %v971, %v971
        %v978 = vmul.f32 %v972, %v972
        %v979 = vmul.f32 %v973, %v973
        %v980 = vmul.f32 %v974, %v974
        %v981 = vmul.f32 %v975, %v975
        %v982 = vmul.f32 %v976, %v976
        %983 = vmatpush.msra.mxu0 %v433
        %984 = vmatpush.msra.mxu0 %v432
        %985 = vmatpush.msra.mxu0 %v431
        %986 = vmatpush.msra.mxu0 %v430
        %987 = vmatpush.msra.mxu0 %v429
        %988 = vmatpush.msra.mxu0 %v428
        %989 = vmatpush.msra.mxu0 %v427
        %990 = vmatpush.msra.mxu0 %v426
        %991 = vmatpush.msra.mxu0 %v425
        %992 = vmatpush.msra.mxu0 %v424
        %993 = vmatpush.msra.mxu0 %v423
        %994 = vmatpush.msra.mxu0 %v422
        %995 = vmatpush.msra.mxu0 %v421
        %996 = vmatpush.msra.mxu0 %v420
        %997 = vmatpush.msra.mxu0 %v419
        %998 = vmatpush.msra.mxu0 %v418
        %999 = vmatmul.f32.gmra.mxu0 %v977
        %v1000 = vpop.f32.mrf.mxu0
        %v1001 = vadd.f32 0.0, %v1000
        %1002 = vmatmul.f32.gmra.mxu0 %v978
        %v1003 = vpop.f32.mrf.mxu0
        %v1004 = vadd.f32 0.0, %v1003
        %1005 = vmatmul.f32.gmra.mxu0 %v979
        %v1006 = vpop.f32.mrf.mxu0
        %v1007 = vadd.f32 0.0, %v1006
        %1008 = vmatmul.f32.gmra.mxu0 %v980
        %v1009 = vpop.f32.mrf.mxu0
        %v1010 = vadd.f32 0.0, %v1009
        %1011 = vmatmul.f32.gmra.mxu0 %v981
        %v1012 = vpop.f32.mrf.mxu0
        %v1013 = vadd.f32 0.0, %v1012
        %1014 = vmatmul.f32.gmra.mxu0 %v982
        %v1015 = vpop.f32.mrf.mxu0
        %v1016 = vadd.f32 0.0, %v1015
        %1017 = vdwg.mxu0
        %v1018 = vmul.f32 %v1001, 0.25
        %v1019 = vmul.f32 %v1004, 0.25
        %v1020 = vmul.f32 %v1007, 0.25
        %v1021 = vmul.f32 %v1010, 0.25
        %v1022 = vmul.f32 %v1013, 0.25
        %v1023 = vmul.f32 %v1016, 0.25
        %v1024 = vmax.f32 %v1018, 0.0
        %v1025 = vmax.f32 %v1019, 0.0
        %v1026 = vmax.f32 %v1020, 0.0
        %v1027 = vmax.f32 %v1021, 0.0
        %v1028 = vmax.f32 %v1022, 0.0
        %v1029 = vmax.f32 %v1023, 0.0
        %v1030 = vadd.f32 %v1024, 1e-05
        %v1031 = vadd.f32 %v1025, 1e-05
        %v1032 = vadd.f32 %v1026, 1e-05
        %v1033 = vadd.f32 %v1027, 1e-05
        %v1034 = vadd.f32 %v1028, 1e-05
        %v1035 = vadd.f32 %v1029, 1e-05
        %v1036 = vrsqrt.pop %v1030
        %v1037 = vmul.f32 %v1036, %v1030
        %v1038 = vmul.f32 %v1037, %v1036
        %v1039 = vmul.f32 0.5, %v1038
        %v1040 = vsub.f32 1.5, %v1039
        %v1041 = vmul.f32 %v1036, %v1040
        %vm1042 = vweird.f32 %v1030
        %vm1043 = vweird.f32 %v1036
        %vm1044 = vmor %vm1042, %vm1043
        %v1045 = vsel %vm1044, %v1036, %v1041
        %v1046 = vrsqrt.pop %v1031
        %v1047 = vmul.f32 %v1046, %v1031
        %v1048 = vmul.f32 %v1047, %v1046
        %v1049 = vmul.f32 0.5, %v1048
        %v1050 = vsub.f32 1.5, %v1049
        %v1051 = vmul.f32 %v1046, %v1050
        %vm1052 = vweird.f32 %v1031
        %vm1053 = vweird.f32 %v1046
        %vm1054 = vmor %vm1052, %vm1053
        %v1055 = vsel %vm1054, %v1046, %v1051
        %v1056 = vrsqrt.pop %v1032
        %v1057 = vmul.f32 %v1056, %v1032
        %v1058 = vmul.f32 %v1057, %v1056
        %v1059 = vmul.f32 0.5, %v1058
        %v1060 = vsub.f32 1.5, %v1059
        %v1061 = vmul.f32 %v1056, %v1060
        %vm1062 = vweird.f32 %v1032
        %vm1063 = vweird.f32 %v1056
        %vm1064 = vmor %vm1062, %vm1063
        %v1065 = vsel %vm1064, %v1056, %v1061
        %v1066 = vrsqrt.pop %v1033
        %v1067 = vmul.f32 %v1066, %v1033
        %v1068 = vmul.f32 %v1067, %v1066
        %v1069 = vmul.f32 0.5, %v1068
        %v1070 = vsub.f32 1.5, %v1069
        %v1071 = vmul.f32 %v1066, %v1070
        %vm1072 = vweird.f32 %v1033
        %vm1073 = vweird.f32 %v1066
        %vm1074 = vmor %vm1072, %vm1073
        %v1075 = vsel %vm1074, %v1066, %v1071
        %v1076 = vrsqrt.pop %v1034
        %v1077 = vmul.f32 %v1076, %v1034
        %v1078 = vmul.f32 %v1077, %v1076
        %v1079 = vmul.f32 0.5, %v1078
        %v1080 = vsub.f32 1.5, %v1079
        %v1081 = vmul.f32 %v1076, %v1080
        %vm1082 = vweird.f32 %v1034
        %vm1083 = vweird.f32 %v1076
        %vm1084 = vmor %vm1082, %vm1083
        %v1085 = vsel %vm1084, %v1076, %v1081
        %v1086 = vrsqrt.pop %v1035
        %v1087 = vmul.f32 %v1086, %v1035
        %v1088 = vmul.f32 %v1087, %v1086
        %v1089 = vmul.f32 0.5, %v1088
        %v1090 = vsub.f32 1.5, %v1089
        %v1091 = vmul.f32 %v1086, %v1090
        %vm1092 = vweird.f32 %v1035
        %vm1093 = vweird.f32 %v1086
        %vm1094 = vmor %vm1092, %vm1093
        %v1095 = vsel %vm1094, %v1086, %v1091
        %v1097 = vsel %vm546, %v1045, 0
        %v1100 = vsel %vm546, %v1055, 0
        %v1103 = vsel %vm546, %v1065, 0
        %v1106 = vsel %vm546, %v1075, 0
        %v1109 = vsel %vm546, %v1085, 0
        %v1112 = vsel %vm546, %v1095, 0
        %1114 = vmatpush.msra.mxu0 0.0
        %1115 = vmatpush.msra.mxu0 0.0
        %1116 = vmatpush.msra.mxu0 0.0
        %1117 = vmatpush.msra.mxu0 0.0
        %1118 = vmatpush.msra.mxu0 0.0
        %1119 = vmatpush.msra.mxu0 0.0
        %1120 = vmatpush.msra.mxu0 0.0
        %1121 = vmatpush.msra.mxu0 0.0
        %1122 = vmatpush.msra.mxu0 0.0
        %1123 = vmatpush.msra.mxu0 0.0
        %1124 = vmatpush.msra.mxu0 0.0
        %1125 = vmatpush.msra.mxu0 0.0
        %1126 = vmatpush.msra.mxu0 %v437
        %1127 = vmatpush.msra.mxu0 %v436
        %1128 = vmatpush.msra.mxu0 %v435
        %1129 = vmatpush.msra.mxu0 %v434
        %1130 = vmatmul.f32.gmra.mxu0 %v1097
        %v1131 = vpop.f32.mrf.mxu0
        %v1132 = vadd.f32 0.0, %v1131
        %1133 = vmatmul.f32.gmra.mxu0 %v1100
        %v1134 = vpop.f32.mrf.mxu0
        %v1135 = vadd.f32 0.0, %v1134
        %1136 = vmatmul.f32.gmra.mxu0 %v1103
        %v1137 = vpop.f32.mrf.mxu0
        %v1138 = vadd.f32 0.0, %v1137
        %1139 = vmatmul.f32.gmra.mxu0 %v1106
        %v1140 = vpop.f32.mrf.mxu0
        %v1141 = vadd.f32 0.0, %v1140
        %1142 = vmatmul.f32.gmra.mxu0 %v1109
        %v1143 = vpop.f32.mrf.mxu0
        %v1144 = vadd.f32 0.0, %v1143
        %1145 = vmatmul.f32.gmra.mxu0 %v1112
        %v1146 = vpop.f32.mrf.mxu0
        %v1147 = vadd.f32 0.0, %v1146
        %1148 = vdwg.mxu0
        %v1149 = vmul.f32 %v971, %v1132
        %v1150 = vmul.f32 %v972, %v1135
        %v1151 = vmul.f32 %v973, %v1138
        %v1152 = vmul.f32 %v974, %v1141
        %v1153 = vmul.f32 %v975, %v1144
        %v1154 = vmul.f32 %v976, %v1147
        %v1155 = vld [vmem:[%s7] sm:$0x1]
        %v1157 = vperm.slane %v1155, 0
        %v1159 = vmul.f32 %v1149, %v1157
        %v1160 = vmul.f32 %v1150, %v1157
        %v1161 = vmul.f32 %v1151, %v1157
        %v1162 = vmul.f32 %v1152, %v1157
        %v1163 = vmul.f32 %v1153, %v1157
        %v1164 = vmul.f32 %v1154, %v1157
        %v1165 = vld [vmem:[%s8] sm:$0x1]
        %v1167 = vperm.slane %v1165, 0
        %v1169 = vadd.f32 %v1159, %v1167
        %v1170 = vadd.f32 %v1160, %v1167
        %v1171 = vadd.f32 %v1161, %v1167
        %v1172 = vadd.f32 %v1162, %v1167
        %v1173 = vadd.f32 %v1163, %v1167
        %v1174 = vadd.f32 %v1164, %v1167
        %v1175 = vmax.f32 %v1169, 0.0
        %v1176 = vmax.f32 %v1170, 0.0
        %v1177 = vmax.f32 %v1171, 0.0
        %v1178 = vmax.f32 %v1172, 0.0
        %v1179 = vmax.f32 %v1173, 0.0
        %v1180 = vmax.f32 %v1174, 0.0
        %v1181 = vadd.f32 %v412, %v1175
        %v1182 = vadd.f32 %v413, %v1176
        %v1183 = vadd.f32 %v414, %v1177
        %v1184 = vadd.f32 %v415, %v1178
        %v1185 = vadd.f32 %v416, %v1179
        %v1186 = vadd.f32 %v417, %v1180
        %v1187 = vmul.f32 %v1181, 0.70710677
        %v1188 = vmul.f32 %v1182, 0.70710677
        %v1189 = vmul.f32 %v1183, 0.70710677
        %v1190 = vmul.f32 %v1184, 0.70710677
        %v1191 = vmul.f32 %v1185, 0.70710677
        %v1192 = vmul.f32 %v1186, 0.70710677
        %1193 = vst [vmem:[%s392] sm:$0xff] %v1187
        %1194 = vst [vmem:[%s392 + $0x8] sm:$0xff] %v1188
        %1195 = vst [vmem:[%s392 + $0x10] sm:$0xff] %v1189
        %1196 = vst [vmem:[%s392 + $0x18] sm:$0xff] %v1190
        %1197 = vst [vmem:[%s392 + $0x20] sm:$0xff] %v1191
        %1198 = vst [vmem:[%s392 + $0x28] sm:$0xff] %v1192
        %s1199 = sand.u32 %s269, 1
        %s1200 = scalar_lea.sflag [#allocation3], %s1199
        %s1201 = sand.u32 %s269, 1
        %s1202 = smul.addr %s1201, 48
        %s1203 = scalar_lea.vmem [#allocation2], %s1202
        // Predicated region
        $region65: #{tpu_custom_call.1} parent=63 // pred_check
          %p1204 = pneg %p279
        $region66: #{tpu_custom_call.1} parent=63 // pred_check_branch
          %1206 = sbr.rel (%p1204) target = $region68
        $region67: #{tpu_custom_call.1} parent=63 // pred_region
          %s1207 = smul.u32 6, %s25
          %s1208 = ssub.s32 7, %s1207
          %p1209 = scmp.lt.s32.totalorder %s1208, 6
          %s1210 = scalar_select %p1209, %s1208, 6
          %s1211 = smul.u32 8, %s1210
          %s1212 = ssub.s32 48, %s1211
          %s1213 = sshll.u32 %s1212, 4
          %1214 = vsyncadd %s1200, %s1213
          %p1215 = scmp.ne.s32.totalorder 0, %s1211
          %s1216 = smul.addr %s1207, 8
          %s1217 = scalar_lea.hbm %s11, %s1216
          %s1218 = smul.u32 8, %s1210
          %s1219 = sshll.u32 %s1203, 4
          %s1220 = int_to_ptr.vmem [resolvable:$true] %s1219
          %s1221 = sshll.u32 %s1217, 4
          %s1222 = int_to_ptr.hbm [resolvable:$true] %s1221
          %s1223 = sshll.u32 %s1218, 4
          %1227 = dma.vmem_to_hbm [thread:$0]  (%p1215), %s1220, %s1223, %s1222, %s1200, 128, 128, 8
        $region68: #{tpu_custom_call.1} parent=63 // pred_fallthru
          _
      $region64: #{tpu_custom_call.1} parent=5 // pred_fallthru
        _
      %p1228 = scmp.le.s32.totalorder 2, %s20
      // Predicated region
      $region69: #{tpu_custom_call.1} parent=5 // pred_check
        %p1229 = pneg %p1228
      $region70: #{tpu_custom_call.1} parent=5 // pred_check_branch
        %1231 = sbr.rel (%p1229) target = $region72
      $region71: #{tpu_custom_call.1} parent=5 // pred_region
        %s1232 = ssub.s32 %s20, 2
        // Predicated region
        $region73: #{tpu_custom_call.1} parent=71 // pred_check
          %p1233 = pneg %p285
        $region74: #{tpu_custom_call.1} parent=71 // pred_check_branch
          %1235 = sbr.rel (%p1233) target = $region76
        $region75: #{tpu_custom_call.1} parent=71 // pred_region
          %s1236 = sand.u32 %s270, 1
          %s1237 = scalar_lea.sflag [#allocation3], %s1236
          %s1238 = sand.u32 %s270, 1
          %s1239 = smul.addr %s1238, 48
          %s1240 = scalar_lea.vmem [#allocation2], %s1239
          %1242 = dma.done %s1237, 768
        $region76: #{tpu_custom_call.1} parent=71 // pred_fallthru
          _
      $region72: #{tpu_custom_call.1} parent=5 // pred_fallthru
        _
    $region6: #{tpu_custom_call.1} parent=1 // loop_footer
      %s24 = sadd.s32 1, %s20
    $region7: #{tpu_custom_call.1} parent=1 // loop_footer_branch
      %19 = sbr.rel target = $region3
    $region8: #{tpu_custom_call.1} parent=1 // loop_exit
      _
    %1243 = vsyncpa [#allocation3], 1
    %s1244 = scalar_lea.sflag [#allocation3], 1
    %1245 = vsyncpa %s1244, 1

</llo_original>
